<compile_context>
chip_gen: v7x
topology: tpu7x:2x2x1
jax: 0.10.0
libtpu: 0.0.40
codegen_flags: <defaults>
</compile_context>

<pallas_src>
import functools

import numpy as np
import jax
import jax.numpy as jnp
from jax import lax
from jax.experimental import pallas as pl
from jax.experimental.pallas import tpu as pltpu

D_MODEL = 32
N_HEADS = 4
D_FF = 64
NEG_INF = -1e9
LN_EPS = 1e-5


# ----------------------------------------------------------------------------
# in-kernel helpers
# ----------------------------------------------------------------------------
def _layernorm(x, gamma, beta):
    mu = jnp.mean(x, axis=-1, keepdims=True)
    var = jnp.mean((x - mu) ** 2, axis=-1, keepdims=True)
    return (x - mu) * lax.rsqrt(var + LN_EPS) * gamma + beta


def _vmem_spec():
    return pl.BlockSpec(memory_space=pltpu.MemorySpace.VMEM)


# ----------------------------------------------------------------------------
# Kernel 1: one nn.TransformerEncoderLayer (post-norm, ReLU, dropout=eval/id).
# Tokens of the whole batch are flattened to one (NK, D) slab; the grid is a
# parallel loop over (tq)-row query tiles.  The attention mask is built
# in-kernel from the scalar-prefetched per-sequence lengths.
# ----------------------------------------------------------------------------
def _transformer_layer_kernel(L, n_real, tq, lens_ref, x_ref, wq_ref, wkvo_ref,
                              w1_ref, w2_ref, vec_ref, o_ref):
    D = D_MODEL
    H = N_HEADS
    Dh = D // H
    B = lens_ref.shape[0]

    x = x_ref[...]                                   # (NK, D) f32 full slab
    NK = x.shape[0]
    vec = vec_ref[...]                               # (16, D + H*D) f32

    qstart = pl.multiple_of(pl.program_id(0) * tq, tq)
    x_q = x_ref[pl.ds(qstart, tq), :]                # (tq, D) f32 residual stream

    bq = vec[0:1, 0:D]
    bkvo = vec[1:2, :]                               # (1, D + H*D)
    bo = vec[2:3, 0:D]
    b1 = vec[3:4, 0:D_FF]
    b2 = vec[4:5, 0:D]
    g1 = vec[5:6, 0:D]
    be1 = vec[6:7, 0:D]
    g2 = vec[7:8, 0:D]
    be2 = vec[8:9, 0:D]

    # --- projections: bf16 operands on the MXU, f32 accumulation.
    #     1/sqrt(Dh) is already folded into wq/bq at pack time.
    q = jnp.dot(x_q.astype(jnp.bfloat16), wq_ref[...],
                preferred_element_type=jnp.float32) + bq            # (tq, D)
    kvo = jnp.dot(x.astype(jnp.bfloat16), wkvo_ref[...],
                  preferred_element_type=jnp.float32) + bkvo        # (NK, D + H*D)
    qb = q.astype(jnp.bfloat16)          # single hoisted cast, then slice heads
    kvob = kvo.astype(jnp.bfloat16)

    # --- block-diagonal + key-padding mask built in-kernel from lengths.
    #     No vector integer division: static loop over B sequences.
    rows = lax.broadcasted_iota(jnp.int32, (tq, NK), 0) + qstart
    cols = lax.broadcasted_iota(jnp.int32, (tq, NK), 1)
    valid = rows >= n_real               # dummy alignment rows attend everywhere
    for b in range(B):
        row_in_b = jnp.logical_and(rows >= b * L, rows < (b + 1) * L)
        col_in_b = jnp.logical_and(cols >= b * L, cols < b * L + lens_ref[b])
        valid = jnp.logical_or(valid, jnp.logical_and(row_in_b, col_in_b))
    bias = jnp.where(valid, 0.0, NEG_INF)                            # (tq, NK)

    # --- per-head attention; Wo folded into the value projection, so the head
    #     outputs accumulate directly into an f32 (tq, D) buffer (no concat).
    attn = jnp.zeros((tq, D), jnp.float32)
    for h in range(H):                                               # static unroll
        qh = qb[:, h * Dh:(h + 1) * Dh]                              # (tq, Dh)
        kh = kvob[:, h * Dh:(h + 1) * Dh]                            # (NK, Dh)
        vho = kvob[:, D + h * D:D + (h + 1) * D]                     # (NK, D)
        s = lax.dot_general(qh, kh, (((1,), (1,)), ((), ())),
                            preferred_element_type=jnp.float32)      # (tq, NK)
        s = s + bias
        s = s - jnp.max(s, axis=-1, keepdims=True)
        p = jnp.exp(s)
        p = p * pl.reciprocal(jnp.sum(p, axis=-1, keepdims=True), approx=True)
        attn = attn + jnp.dot(p.astype(jnp.bfloat16), vho,
                              preferred_element_type=jnp.float32)
    attn = attn + bo

    x1 = _layernorm(x_q + attn, g1, be1)
    ff = jnp.maximum(jnp.dot(x1.astype(jnp.bfloat16), w1_ref[...],
                             preferred_element_type=jnp.float32) + b1, 0.0)
    ff = jnp.dot(ff.astype(jnp.bfloat16), w2_ref[...],
                 preferred_element_type=jnp.float32) + b2
    o_ref[...] = _layernorm(x1 + ff, g2, be2)


def flat_transformer_layer(xf, lens, lp, *, L, n_real, tq):
    NK, D = xf.shape
    W = D + N_HEADS * D
    grid = NK // tq
    kernel = functools.partial(_transformer_layer_kernel, L, n_real, tq)
    return pl.pallas_call(
        kernel,
        out_shape=jax.ShapeDtypeStruct((NK, D), jnp.float32),
        grid_spec=pltpu.PrefetchScalarGridSpec(
            num_scalar_prefetch=1,
            grid=(grid,),
            in_specs=[
                pl.BlockSpec((NK, D), lambda i, lens: (0, 0)),        # K/V slab (resident)
                pl.BlockSpec((D, D), lambda i, lens: (0, 0)),         # wq (scaled)
                pl.BlockSpec((D, W), lambda i, lens: (0, 0)),         # wk | Wv_h@Wo_h
                pl.BlockSpec((D, D_FF), lambda i, lens: (0, 0)),      # w1
                pl.BlockSpec((D_FF, D), lambda i, lens: (0, 0)),      # w2
                pl.BlockSpec((16, W), lambda i, lens: (0, 0)),        # packed biases / LN
            ],
            out_specs=pl.BlockSpec((tq, D), lambda i, lens: (i, 0)),
        ),
        compiler_params=pltpu.CompilerParams(
            dimension_semantics=("parallel",),
            vmem_limit_bytes=32 * 1024 * 1024,
        ),
    )(lens, xf, lp["wq"], lp["wkvo"], lp["w1"], lp["w2"], lp["vecs"])


def run_transformer_stack(x, lengths_incl_cls, layer_params_list):
    """x: (B, L, D) f32 with PE + cls already applied."""
    B, L, D = x.shape
    N = B * L
    if N <= 128:
        tq = -(-N // 8) * 8                       # sublane-aligned single tile
        nk = tq
    else:
        tq = 128
        nk = -(-N // tq) * tq
    xf = x.reshape(N, D)
    if nk > N:
        xf = jnp.concatenate([xf, jnp.zeros((nk - N, D), jnp.float32)], axis=0)
    lens = jnp.asarray(np.asarray(lengths_incl_cls, np.int32))
    # TODO(synk): if n_layers > 1 becomes a hot path, fuse the layer stack into
    # one pallas_call with a layer grid axis and VMEM-resident activations.
    for lp in layer_params_list:
        xf = flat_transformer_layer(xf, lens, lp, L=L, n_real=N, tq=tq)
    return xf[:N].reshape(B, L, D)


# ----------------------------------------------------------------------------
# Kernel 2: patch_attn pooling over ALL patches in one call.
# Linear -> LayerNorm -> ReLU -> Linear(->1), masked softmax over each patch,
# weighted sum.  Everything stays 2-D / lane-dense; one MXU matmul per step.
# ----------------------------------------------------------------------------
def _patch_pool_kernel(Lp, x_ref, cb_ref, w1_ref, w2_ref, vec_ref, o_ref):
    xf = x_ref[...]                      # (P*Lp, D) f32 flattened padded patches
    cb = cb_ref[...]                     # (1, P*Lp) f32 key-padding bias
    vec = vec_ref[...]                   # (8, D) f32 packed params
    P, D = o_ref.shape
    PL = xf.shape[0]

    b1 = vec[0:1, :]
    g = vec[1:2, :]
    be = vec[2:3, :]
    b2 = vec[3:4, 0:1]

    h = jnp.dot(xf.astype(jnp.bfloat16), w1_ref[...],
                preferred_element_type=jnp.float32) + b1             # (PL, D)
    h = _layernorm(h, g, be)
    h = jnp.maximum(h, 0.0)
    # lane-dense scores (1, PL): w2 (1, D) against h with contraction on D
    s = lax.dot_general(w2_ref[...], h.astype(jnp.bfloat16),
                        (((1,), (1,)), ((), ())),
                        preferred_element_type=jnp.float32) + b2      # (1, PL)

    # patch block-diagonal membership (in-kernel, no division) + key padding
    rows = lax.broadcasted_iota(jnp.int32, (P, PL), 0)
    cols = lax.broadcasted_iota(jnp.int32, (P, PL), 1)
    member = jnp.logical_and(cols >= rows * Lp, cols < rows * Lp + Lp)
    bias = jnp.where(member, 0.0, NEG_INF) + cb                       # (P, PL)

    sc = s + bias
    sc = sc - jnp.max(sc, axis=-1, keepdims=True)
    p = jnp.exp(sc)
    p = p * pl.reciprocal(jnp.sum(p, axis=-1, keepdims=True), approx=True)
    # weighted sum as one MXU matmul (f32 to preserve the pooled activations)
    o_ref[...] = jnp.dot(p, xf, preferred_element_type=jnp.float32)   # (P, D)


def patch_attn_pool(x_flat, col_bias, pp, P, Lp):
    PL, D = x_flat.shape
    kernel = functools.partial(_patch_pool_kernel, Lp)
    return pl.pallas_call(
        kernel,
        out_shape=jax.ShapeDtypeStruct((P, D), jnp.float32),
        in_specs=[_vmem_spec() for _ in range(5)],
        out_specs=_vmem_spec(),
        compiler_params=pltpu.CompilerParams(vmem_limit_bytes=32 * 1024 * 1024),
    )(x_flat, col_bias, pp["w1"], pp["w2"], pp["vecs"])


# ----------------------------------------------------------------------------
# Host-side glue (positional encoding, small masks, host-built gather indices)
# ----------------------------------------------------------------------------
# TODO(synk): PosEmbedding source not provided in model/network.py; standard
# sinusoidal positional encoding is assumed.
def sinusoidal_pe(L, D):
    pos = np.arange(L, dtype=np.float32)[:, None]
    div = np.exp(np.arange(0, D, 2, dtype=np.float32) * (-np.log(10000.0) / D))
    pe = np.zeros((L, D), np.float32)
    pe[:, 0::2] = np.sin(pos * div)
    pe[:, 1::2] = np.cos(pos * div)
    return jnp.asarray(pe)[None]         # (1, L, D)


def patch_col_bias(patch_len, Lp):
    """O(P*Lp) key-padding bias for the flattened patch layout."""
    patch_len = np.asarray(patch_len)
    P = patch_len.shape[0]
    pos = np.arange(P * Lp)
    valid = (pos % Lp) < patch_len[pos // Lp]
    return jnp.asarray(np.where(valid, 0.0, NEG_INF).astype(np.float32))[None, :]


def build_patch_gather(traj_len, L_wo_cls, patch_len):
    """Indices replicating: flatten valid tokens then split into padded patches."""
    src = []
    for b in range(len(traj_len)):
        for l in range(int(traj_len[b])):
            src.append(b * L_wo_cls + l)
    src = np.asarray(src, np.int32)
    P = len(patch_len)
    maxp = int(np.max(patch_len))
    offsets = np.concatenate([[0], np.cumsum(patch_len)[:-1]]).astype(np.int64)
    gidx = np.zeros((P, maxp), np.int32)
    gmask = np.zeros((P, maxp), np.float32)
    for p in range(P):
        for j in range(int(patch_len[p])):
            gidx[p, j] = src[offsets[p] + j]
            gmask[p, j] = 1.0
    return gidx, gmask


def build_align(traj_len_next):
    num = len(traj_len_next)
    maxl = int(np.max(traj_len_next))
    idx = np.zeros((num, maxl), np.int32)
    msk = np.zeros((num, maxl), np.float32)
    c = 0
    for t in range(num):
        for j in range(int(traj_len_next[t])):
            idx[t, j] = c
            msk[t, j] = 1.0
            c += 1
    return idx, msk


# ----------------------------------------------------------------------------
# Full forward (cls=True path), dropout = eval mode (identity)
# ----------------------------------------------------------------------------
def encoder_forward(x, traj_len_s5, traj_len_s3, patch_len_s3,
                    traj_len_s2, patch_len_s2, params):
    B, L_in, D = x.shape

    # --- stage s5 ---
    cls = jnp.broadcast_to(params["cls_token"][None, None, :], (B, 1, D))
    x5 = jnp.concatenate([cls, x], axis=1)                         # (B, L_in+1, D)
    L5 = int(np.max(traj_len_s5)) + 1
    x5 = x5 + sinusoidal_pe(L5, D)
    x_s5 = run_transformer_stack(x5, np.asarray(traj_len_s5) + 1, params["enc_s5"])

    # --- regroup s5 tokens into s3 patches + attention pooling ---
    # TODO(synk): this host-built gather could be fused into the pooling kernel
    # via scalar-prefetched offsets; kept as plain-JAX glue here.
    x5_wo_cls = x_s5[:, 1:, :]
    gidx, gmask = build_patch_gather(traj_len_s5, L_in, patch_len_s3)
    P3, Lp3 = gidx.shape
    x_flat = x5_wo_cls.reshape(B * L_in, D)
    x_s3_patches = (x_flat[jnp.asarray(gidx)] *
                    jnp.asarray(gmask)[..., None]).reshape(P3 * Lp3, D)
    x_s3_pool = patch_attn_pool(x_s3_patches, patch_col_bias(patch_len_s3, Lp3),
                                params["pattn_s3"], P3, Lp3)        # (P3, D)

    # --- align per trajectory, stage s3 ---
    aidx, amask = build_align(traj_len_s3)
    x_s3_aligned = x_s3_pool[jnp.asarray(aidx)] * jnp.asarray(amask)[..., None]
    x3 = jnp.concatenate([x_s5[:, 0:1, :], x_s3_aligned], axis=1)
    L3 = x3.shape[1]
    x3 = x3 + sinusoidal_pe(L3, D)
    x_s3 = run_transformer_stack(x3, np.asarray(traj_len_s3) + 1, params["enc_s3"])

    # --- regroup s3 tokens into s2 patches + attention pooling ---
    x3_wo_cls = x_s3[:, 1:, :]
    gidx2, gmask2 = build_patch_gather(traj_len_s3, x3_wo_cls.shape[1], patch_len_s2)
    P2, Lp2 = gidx2.shape
    x3_flat = x3_wo_cls.reshape(-1, D)
    x_s2_patches = (x3_flat[jnp.asarray(gidx2)] *
                    jnp.asarray(gmask2)[..., None]).reshape(P2 * Lp2, D)
    x_s2_pool = patch_attn_pool(x_s2_patches, patch_col_bias(patch_len_s2, Lp2),
                                params["pattn_s2"], P2, Lp2)        # (P2, D)

    # --- align per trajectory, stage s2 ---
    aidx2, amask2 = build_align(traj_len_s2)
    x_s2_aligned = x_s2_pool[jnp.asarray(aidx2)] * jnp.asarray(amask2)[..., None]
    x2 = jnp.concatenate([x_s3[:, 0:1, :], x_s2_aligned], axis=1)
    L2 = x2.shape[1]
    # replicate the module's consistency assert
    valid = (np.arange(L2)[None, :] < (np.asarray(traj_len_s2) + 1)[:, None]).sum(1)
    assert (valid == np.asarray(traj_len_s2) + 1).all()
    x2 = x2 + sinusoidal_pe(L2, D)
    x_s2 = run_transformer_stack(x2, np.asarray(traj_len_s2) + 1, params["enc_s2"])

    return x_s5, x_s3, x_s2


# ----------------------------------------------------------------------------
# Parameter init + host-side packing (torch Linear W stored as (in, out),
# i.e. already transposed for `x @ W + b`).  The attention scale is folded
# into Wq/bq and Wo is folded per head into the value projection.
# ----------------------------------------------------------------------------
def pack_layer_params(p, D=D_MODEL, F=D_FF):
    H = N_HEADS
    Dh = D // H
    scale = 1.0 / float(np.sqrt(Dh))
    wq = p["wq"] * scale
    bq = p["bq"] * scale
    wv_o, bv_o = [], []
    for h in range(H):
        wo_h = p["wo"][h * Dh:(h + 1) * Dh, :]                       # (Dh, D)
        wv_o.append(p["wv"][:, h * Dh:(h + 1) * Dh] @ wo_h)          # (D, D)
        bv_o.append(p["bv"][:, h * Dh:(h + 1) * Dh] @ wo_h)          # (1, D)
    wkvo = jnp.concatenate([p["wk"]] + wv_o, axis=1)                 # (D, D + H*D)
    bkvo = jnp.concatenate([p["bk"]] + bv_o, axis=1)                 # (1, D + H*D)
    W = D + H * D

    def row(a):
        return jnp.pad(a, ((0, 0), (0, W - a.shape[1])))

    vecs = jnp.concatenate(
        [row(bq), bkvo, row(p["bo"]), row(p["b1"]), row(p["b2"]),
         row(p["g1"]), row(p["be1"]), row(p["g2"]), row(p["be2"]),
         jnp.zeros((7, W), jnp.float32)], axis=0).astype(jnp.float32)  # (16, W)
    return dict(wq=wq.astype(jnp.bfloat16),
                wkvo=wkvo.astype(jnp.bfloat16),
                w1=p["w1"].astype(jnp.bfloat16),
                w2=p["w2"].astype(jnp.bfloat16),
                vecs=vecs)


def pack_patch_attn_params(p, D=D_MODEL):
    def row(a):
        return jnp.pad(a, ((0, 0), (0, D - a.shape[1])))
    vecs = jnp.concatenate([p["b1"], p["g"], p["be"], row(p["b2"]),
                            jnp.zeros((4, D), jnp.float32)],
                           axis=0).astype(jnp.float32)               # (8, D)
    return dict(w1=p["w1"].astype(jnp.bfloat16),
                w2=p["w2"].astype(jnp.bfloat16),                      # (1, D)
                vecs=vecs)


def init_layer_params(key, D, F):
    ks = jax.random.split(key, 6)
    s = 0.05
    raw = dict(
        wq=jax.random.normal(ks[0], (D, D), jnp.float32) * s, bq=jnp.zeros((1, D)),
        wk=jax.random.normal(ks[1], (D, D), jnp.float32) * s, bk=jnp.zeros((1, D)),
        wv=jax.random.normal(ks[2], (D, D), jnp.float32) * s, bv=jnp.zeros((1, D)),
        wo=jax.random.normal(ks[3], (D, D), jnp.float32) * s, bo=jnp.zeros((1, D)),
        w1=jax.random.normal(ks[4], (D, F), jnp.float32) * s, b1=jnp.zeros((1, F)),
        w2=jax.random.normal(ks[5], (F, D), jnp.float32) * s, b2=jnp.zeros((1, D)),
        g1=jnp.ones((1, D)), be1=jnp.zeros((1, D)),
        g2=jnp.ones((1, D)), be2=jnp.zeros((1, D)),
    )
    return pack_layer_params(raw, D, F)


def init_patch_attn_params(key, D):
    k1, k2 = jax.random.split(key)
    s = 0.05
    raw = dict(
        w1=jax.random.normal(k1, (D, D), jnp.float32) * s, b1=jnp.zeros((1, D)),
        g=jnp.ones((1, D)), be=jnp.zeros((1, D)),
        w2=jax.random.normal(k2, (1, D), jnp.float32) * s, b2=jnp.zeros((1, 1)),
    )
    return pack_patch_attn_params(raw, D)


if __name__ == "__main__":
    D = D_MODEL
    # consistent hierarchy of lengths:
    traj_len_s5 = np.array([12, 8], np.int32)            # sum = 20 s5 tokens
    patch_len_s3 = np.array([3, 4, 5, 4, 4], np.int32)   # sum = 20 -> 5 patches
    traj_len_s3 = np.array([3, 2], np.int32)              # sum = 5
    patch_len_s2 = np.array([2, 1, 2], np.int32)          # sum = 5 -> 3 patches
    traj_len_s2 = np.array([2, 1], np.int32)              # sum = 3
    assert patch_len_s3.sum() == traj_len_s5.sum()
    assert traj_len_s3.sum() == len(patch_len_s3)
    assert patch_len_s2.sum() == traj_len_s3.sum()
    assert traj_len_s2.sum() == len(patch_len_s2)

    B = traj_len_s5.shape[0]
    L_in = int(traj_len_s5.max())

    key = jax.random.PRNGKey(0)
    kx, kp = jax.random.split(key)
    x = jax.random.normal(kx, (B, L_in, D), jnp.float32)

    keys = jax.random.split(kp, 6)
    params = dict(
        cls_token=jax.random.normal(keys[0], (D,), jnp.float32),
        enc_s5=[init_layer_params(keys[1], D, D_FF)],    # n_layers_s5 = 1
        enc_s3=[init_layer_params(keys[2], D, D_FF)],    # n_layers_s3 = 1
        enc_s2=[init_layer_params(keys[3], D, D_FF)],    # n_layers_s2 = 1
        pattn_s3=init_patch_attn_params(keys[4], D),
        pattn_s2=init_patch_attn_params(keys[5], D),
    )

    x_s5, x_s3, x_s2 = encoder_forward(x, traj_len_s5, traj_len_s3, patch_len_s3,
                                       traj_len_s2, patch_len_s2, params)
    jax.block_until_ready((x_s5, x_s3, x_s2))
    assert x_s5.shape == (B, L_in + 1, D)
    assert x_s3.shape == (B, int(traj_len_s3.max()) + 1, D)
    assert x_s2.shape == (B, int(traj_len_s2.max()) + 1, D)
    assert np.isfinite(np.asarray(x_s5)).all()
    assert np.isfinite(np.asarray(x_s3)).all()
    assert np.isfinite(np.asarray(x_s2)).all()
    print("KERNEL_OK")
</pallas_src>

<mosaic_0001>
module attributes {stable_mosaic.version = 11 : i64} {
  func.func @_transformer_layer_kernel(%arg0: i32, %arg1: memref<2xi32, #tpu.memory_space<smem>>, %arg2: memref<32x32xf32, #tpu.memory_space<vmem>>, %arg3: memref<32x32xbf16, #tpu.memory_space<vmem>>, %arg4: memref<32x160xbf16, #tpu.memory_space<vmem>>, %arg5: memref<32x64xbf16, #tpu.memory_space<vmem>>, %arg6: memref<64x32xbf16, #tpu.memory_space<vmem>>, %arg7: memref<16x160xf32, #tpu.memory_space<vmem>>, %arg8: memref<32x32xf32, #tpu.memory_space<vmem>>) attributes {dimension_semantics = [#tpu.dimension_semantics<parallel>], iteration_bounds = array<i64: 1>, scalar_prefetch = 1 : i64, scratch_operands = 0 : i64, tpu.core_type = #tpu.core_type<tc>, window_params = [{pipeline_mode = #tpu.pipeline_mode<synchronous>, transform_indices = @transform_0, window_bounds = array<i64: 32, 32>}, {pipeline_mode = #tpu.pipeline_mode<synchronous>, transform_indices = @transform_1, window_bounds = array<i64: 32, 32>}, {pipeline_mode = #tpu.pipeline_mode<synchronous>, transform_indices = @transform_2, window_bounds = array<i64: 32, 160>}, {pipeline_mode = #tpu.pipeline_mode<synchronous>, transform_indices = @transform_3, window_bounds = array<i64: 32, 64>}, {pipeline_mode = #tpu.pipeline_mode<synchronous>, transform_indices = @transform_4, window_bounds = array<i64: 64, 32>}, {pipeline_mode = #tpu.pipeline_mode<synchronous>, transform_indices = @transform_5, window_bounds = array<i64: 16, 160>}, {transform_indices = @transform_6, window_bounds = array<i64: 32, 32>}]} {
    %c0 = arith.constant 0 : index
    %c0_0 = arith.constant 0 : index
    %0 = vector.load %arg2[%c0, %c0_0] : memref<32x32xf32, #tpu.memory_space<vmem>>, vector<32x32xf32>
    %c0_1 = arith.constant 0 : index
    %c0_2 = arith.constant 0 : index
    %1 = vector.load %arg7[%c0_1, %c0_2] : memref<16x160xf32, #tpu.memory_space<vmem>>, vector<16x160xf32>
    %c32_i32 = arith.constant 32 : i32
    %2 = arith.muli %arg0, %c32_i32 : i32
    %3 = tpu.assume_multiple %2, 32 : i32
    %4 = arith.index_cast %3 : i32 to index
    %c0_3 = arith.constant 0 : index
    %5 = vector.load %arg2[%4, %c0_3] : memref<32x32xf32, #tpu.memory_space<vmem>>, vector<32x32xf32>
    %6 = vector.extract_strided_slice %1 {offsets = [0, 0], sizes = [1, 32], strides = [1, 1]} : vector<16x160xf32> to vector<1x32xf32>
    %7 = vector.extract_strided_slice %1 {offsets = [1, 0], sizes = [1, 160], strides = [1, 1]} : vector<16x160xf32> to vector<1x160xf32>
    %8 = vector.extract_strided_slice %1 {offsets = [2, 0], sizes = [1, 32], strides = [1, 1]} : vector<16x160xf32> to vector<1x32xf32>
    %9 = vector.extract_strided_slice %1 {offsets = [3, 0], sizes = [1, 64], strides = [1, 1]} : vector<16x160xf32> to vector<1x64xf32>
    %10 = vector.extract_strided_slice %1 {offsets = [4, 0], sizes = [1, 32], strides = [1, 1]} : vector<16x160xf32> to vector<1x32xf32>
    %11 = vector.extract_strided_slice %1 {offsets = [5, 0], sizes = [1, 32], strides = [1, 1]} : vector<16x160xf32> to vector<1x32xf32>
    %12 = vector.extract_strided_slice %1 {offsets = [6, 0], sizes = [1, 32], strides = [1, 1]} : vector<16x160xf32> to vector<1x32xf32>
    %13 = vector.extract_strided_slice %1 {offsets = [7, 0], sizes = [1, 32], strides = [1, 1]} : vector<16x160xf32> to vector<1x32xf32>
    %14 = vector.extract_strided_slice %1 {offsets = [8, 0], sizes = [1, 32], strides = [1, 1]} : vector<16x160xf32> to vector<1x32xf32>
    %15 = arith.truncf %5 : vector<32x32xf32> to vector<32x32xbf16>
    %c0_4 = arith.constant 0 : index
    %c0_5 = arith.constant 0 : index
    %16 = vector.load %arg3[%c0_4, %c0_5] : memref<32x32xbf16, #tpu.memory_space<vmem>>, vector<32x32xbf16>
    %cst = arith.constant dense<0.000000e+00> : vector<32x32xf32>
    %17 = tpu.matmul %15, %16, %cst {dimension_numbers = #tpu.dot_dimension_numbers<[1], [0], [0], [1], [0, 0, 1, 1], [], []>} : vector<32x32xbf16>, vector<32x32xbf16>, vector<32x32xf32> -> vector<32x32xf32>
    %18 = vector.broadcast %6 : vector<1x32xf32> to vector<32x32xf32>
    %19 = arith.addf %17, %18 : vector<32x32xf32>
    %20 = arith.truncf %0 : vector<32x32xf32> to vector<32x32xbf16>
    %c0_6 = arith.constant 0 : index
    %c0_7 = arith.constant 0 : index
    %21 = vector.load %arg4[%c0_6, %c0_7] : memref<32x160xbf16, #tpu.memory_space<vmem>>, vector<32x160xbf16>
    %cst_8 = arith.constant dense<0.000000e+00> : vector<32x160xf32>
    %22 = tpu.matmul %20, %21, %cst_8 {dimension_numbers = #tpu.dot_dimension_numbers<[1], [0], [0], [1], [0, 0, 1, 1], [], []>} : vector<32x32xbf16>, vector<32x160xbf16>, vector<32x160xf32> -> vector<32x160xf32>
    %23 = vector.broadcast %7 : vector<1x160xf32> to vector<32x160xf32>
    %24 = arith.addf %22, %23 : vector<32x160xf32>
    %25 = arith.truncf %19 : vector<32x32xf32> to vector<32x32xbf16>
    %26 = arith.truncf %24 : vector<32x160xf32> to vector<32x160xbf16>
    %27 = tpu.iota {dimensions = array<i32: 0>} : vector<32x32xi32>
    %28 = vector.broadcast %3 : i32 to vector<32x32xi32>
    %29 = arith.addi %27, %28 : vector<32x32xi32>
    %30 = tpu.iota {dimensions = array<i32: 1>} : vector<32x32xi32>
    %c26_i32 = arith.constant 26 : i32
    %31 = vector.broadcast %c26_i32 : i32 to vector<32x32xi32>
    %32 = arith.cmpi sge, %29, %31 : vector<32x32xi32>
    %c0_i32 = arith.constant 0 : i32
    %33 = vector.broadcast %c0_i32 : i32 to vector<32x32xi32>
    %34 = arith.cmpi sge, %29, %33 : vector<32x32xi32>
    %c13_i32 = arith.constant 13 : i32
    %35 = vector.broadcast %c13_i32 : i32 to vector<32x32xi32>
    %36 = arith.cmpi slt, %29, %35 : vector<32x32xi32>
    %37 = arith.andi %34, %36 : vector<32x32xi1>
    %c0_i32_9 = arith.constant 0 : i32
    %38 = vector.broadcast %c0_i32_9 : i32 to vector<32x32xi32>
    %39 = arith.cmpi sge, %30, %38 : vector<32x32xi32>
    %c0_10 = arith.constant 0 : index
    %40 = memref.load %arg1[%c0_10] : memref<2xi32, #tpu.memory_space<smem>>
    %c0_i32_11 = arith.constant 0 : i32
    %41 = arith.addi %c0_i32_11, %40 : i32
    %42 = vector.broadcast %41 : i32 to vector<32x32xi32>
    %43 = arith.cmpi slt, %30, %42 : vector<32x32xi32>
    %44 = arith.andi %39, %43 : vector<32x32xi1>
    %45 = arith.andi %37, %44 : vector<32x32xi1>
    %46 = arith.ori %32, %45 : vector<32x32xi1>
    %c13_i32_12 = arith.constant 13 : i32
    %47 = vector.broadcast %c13_i32_12 : i32 to vector<32x32xi32>
    %48 = arith.cmpi sge, %29, %47 : vector<32x32xi32>
    %c26_i32_13 = arith.constant 26 : i32
    %49 = vector.broadcast %c26_i32_13 : i32 to vector<32x32xi32>
    %50 = arith.cmpi slt, %29, %49 : vector<32x32xi32>
    %51 = arith.andi %48, %50 : vector<32x32xi1>
    %c13_i32_14 = arith.constant 13 : i32
    %52 = vector.broadcast %c13_i32_14 : i32 to vector<32x32xi32>
    %53 = arith.cmpi sge, %30, %52 : vector<32x32xi32>
    %c1 = arith.constant 1 : index
    %54 = memref.load %arg1[%c1] : memref<2xi32, #tpu.memory_space<smem>>
    %c13_i32_15 = arith.constant 13 : i32
    %55 = arith.addi %c13_i32_15, %54 : i32
    %56 = vector.broadcast %55 : i32 to vector<32x32xi32>
    %57 = arith.cmpi slt, %30, %56 : vector<32x32xi32>
    %58 = arith.andi %53, %57 : vector<32x32xi1>
    %59 = arith.andi %51, %58 : vector<32x32xi1>
    %60 = arith.ori %46, %59 : vector<32x32xi1>
    %cst_16 = arith.constant 0.000000e+00 : f32
    %cst_17 = arith.constant -1.000000e+09 : f32
    %61 = vector.broadcast %cst_16 : f32 to vector<32x32xf32>
    %62 = vector.broadcast %cst_17 : f32 to vector<32x32xf32>
    %63 = arith.select %60, %61, %62 : vector<32x32xi1>, vector<32x32xf32>
    %cst_18 = arith.constant 0.000000e+00 : f32
    %64 = vector.broadcast %cst_18 : f32 to vector<32x32xf32>
    %65 = vector.extract_strided_slice %25 {offsets = [0, 0], sizes = [32, 8], strides = [1, 1]} : vector<32x32xbf16> to vector<32x8xbf16>
    %66 = vector.extract_strided_slice %26 {offsets = [0, 0], sizes = [32, 8], strides = [1, 1]} : vector<32x160xbf16> to vector<32x8xbf16>
    %67 = vector.extract_strided_slice %26 {offsets = [0, 32], sizes = [32, 32], strides = [1, 1]} : vector<32x160xbf16> to vector<32x32xbf16>
    %cst_19 = arith.constant dense<0.000000e+00> : vector<32x32xf32>
    %68 = tpu.matmul %65, %66, %cst_19 {dimension_numbers = #tpu.dot_dimension_numbers<[1], [1], [0], [0], [0, 0, 1, 0], [], []>} : vector<32x8xbf16>, vector<32x8xbf16>, vector<32x32xf32> -> vector<32x32xf32>
    %69 = arith.addf %68, %63 : vector<32x32xf32>
    %cst_20 = arith.constant dense<0xFF800000> : vector<32xf32>
    %70 = vector.multi_reduction <maximumf>, %69, %cst_20 [1] : vector<32x32xf32> to vector<32xf32>
    %71 = vector.shape_cast %70 : vector<32xf32> to vector<32x1xf32>
    %72 = vector.broadcast %71 : vector<32x1xf32> to vector<32x32xf32>
    %73 = arith.subf %69, %72 : vector<32x32xf32>
    %74 = math.exp %73 : vector<32x32xf32>
    %cst_21 = arith.constant dense<0.000000e+00> : vector<32xf32>
    %75 = vector.multi_reduction <add>, %74, %cst_21 [1] : vector<32x32xf32> to vector<32xf32>
    %76 = vector.shape_cast %75 : vector<32xf32> to vector<32x1xf32>
    %77 = tpu.reciprocal %76 {approx = true} : vector<32x1xf32> -> vector<32x1xf32>
    %78 = vector.broadcast %77 : vector<32x1xf32> to vector<32x32xf32>
    %79 = arith.mulf %74, %78 : vector<32x32xf32>
    %80 = arith.truncf %79 : vector<32x32xf32> to vector<32x32xbf16>
    %cst_22 = arith.constant dense<0.000000e+00> : vector<32x32xf32>
    %81 = tpu.matmul %80, %67, %cst_22 {dimension_numbers = #tpu.dot_dimension_numbers<[1], [0], [0], [1], [0, 0, 1, 1], [], []>} : vector<32x32xbf16>, vector<32x32xbf16>, vector<32x32xf32> -> vector<32x32xf32>
    %82 = arith.addf %64, %81 : vector<32x32xf32>
    %83 = vector.extract_strided_slice %25 {offsets = [0, 8], sizes = [32, 8], strides = [1, 1]} : vector<32x32xbf16> to vector<32x8xbf16>
    %84 = vector.extract_strided_slice %26 {offsets = [0, 8], sizes = [32, 8], strides = [1, 1]} : vector<32x160xbf16> to vector<32x8xbf16>
    %85 = vector.extract_strided_slice %26 {offsets = [0, 64], sizes = [32, 32], strides = [1, 1]} : vector<32x160xbf16> to vector<32x32xbf16>
    %cst_23 = arith.constant dense<0.000000e+00> : vector<32x32xf32>
    %86 = tpu.matmul %83, %84, %cst_23 {dimension_numbers = #tpu.dot_dimension_numbers<[1], [1], [0], [0], [0, 0, 1, 0], [], []>} : vector<32x8xbf16>, vector<32x8xbf16>, vector<32x32xf32> -> vector<32x32xf32>
    %87 = arith.addf %86, %63 : vector<32x32xf32>
    %cst_24 = arith.constant dense<0xFF800000> : vector<32xf32>
    %88 = vector.multi_reduction <maximumf>, %87, %cst_24 [1] : vector<32x32xf32> to vector<32xf32>
    %89 = vector.shape_cast %88 : vector<32xf32> to vector<32x1xf32>
    %90 = vector.broadcast %89 : vector<32x1xf32> to vector<32x32xf32>
    %91 = arith.subf %87, %90 : vector<32x32xf32>
    %92 = math.exp %91 : vector<32x32xf32>
    %cst_25 = arith.constant dense<0.000000e+00> : vector<32xf32>
    %93 = vector.multi_reduction <add>, %92, %cst_25 [1] : vector<32x32xf32> to vector<32xf32>
    %94 = vector.shape_cast %93 : vector<32xf32> to vector<32x1xf32>
    %95 = tpu.reciprocal %94 {approx = true} : vector<32x1xf32> -> vector<32x1xf32>
    %96 = vector.broadcast %95 : vector<32x1xf32> to vector<32x32xf32>
    %97 = arith.mulf %92, %96 : vector<32x32xf32>
    %98 = arith.truncf %97 : vector<32x32xf32> to vector<32x32xbf16>
    %cst_26 = arith.constant dense<0.000000e+00> : vector<32x32xf32>
    %99 = tpu.matmul %98, %85, %cst_26 {dimension_numbers = #tpu.dot_dimension_numbers<[1], [0], [0], [1], [0, 0, 1, 1], [], []>} : vector<32x32xbf16>, vector<32x32xbf16>, vector<32x32xf32> -> vector<32x32xf32>
    %100 = arith.addf %82, %99 : vector<32x32xf32>
    %101 = vector.extract_strided_slice %25 {offsets = [0, 16], sizes = [32, 8], strides = [1, 1]} : vector<32x32xbf16> to vector<32x8xbf16>
    %102 = vector.extract_strided_slice %26 {offsets = [0, 16], sizes = [32, 8], strides = [1, 1]} : vector<32x160xbf16> to vector<32x8xbf16>
    %103 = vector.extract_strided_slice %26 {offsets = [0, 96], sizes = [32, 32], strides = [1, 1]} : vector<32x160xbf16> to vector<32x32xbf16>
    %cst_27 = arith.constant dense<0.000000e+00> : vector<32x32xf32>
    %104 = tpu.matmul %101, %102, %cst_27 {dimension_numbers = #tpu.dot_dimension_numbers<[1], [1], [0], [0], [0, 0, 1, 0], [], []>} : vector<32x8xbf16>, vector<32x8xbf16>, vector<32x32xf32> -> vector<32x32xf32>
    %105 = arith.addf %104, %63 : vector<32x32xf32>
    %cst_28 = arith.constant dense<0xFF800000> : vector<32xf32>
    %106 = vector.multi_reduction <maximumf>, %105, %cst_28 [1] : vector<32x32xf32> to vector<32xf32>
    %107 = vector.shape_cast %106 : vector<32xf32> to vector<32x1xf32>
    %108 = vector.broadcast %107 : vector<32x1xf32> to vector<32x32xf32>
    %109 = arith.subf %105, %108 : vector<32x32xf32>
    %110 = math.exp %109 : vector<32x32xf32>
    %cst_29 = arith.constant dense<0.000000e+00> : vector<32xf32>
    %111 = vector.multi_reduction <add>, %110, %cst_29 [1] : vector<32x32xf32> to vector<32xf32>
    %112 = vector.shape_cast %111 : vector<32xf32> to vector<32x1xf32>
    %113 = tpu.reciprocal %112 {approx = true} : vector<32x1xf32> -> vector<32x1xf32>
    %114 = vector.broadcast %113 : vector<32x1xf32> to vector<32x32xf32>
    %115 = arith.mulf %110, %114 : vector<32x32xf32>
    %116 = arith.truncf %115 : vector<32x32xf32> to vector<32x32xbf16>
    %cst_30 = arith.constant dense<0.000000e+00> : vector<32x32xf32>
    %117 = tpu.matmul %116, %103, %cst_30 {dimension_numbers = #tpu.dot_dimension_numbers<[1], [0], [0], [1], [0, 0, 1, 1], [], []>} : vector<32x32xbf16>, vector<32x32xbf16>, vector<32x32xf32> -> vector<32x32xf32>
    %118 = arith.addf %100, %117 : vector<32x32xf32>
    %119 = vector.extract_strided_slice %25 {offsets = [0, 24], sizes = [32, 8], strides = [1, 1]} : vector<32x32xbf16> to vector<32x8xbf16>
    %120 = vector.extract_strided_slice %26 {offsets = [0, 24], sizes = [32, 8], strides = [1, 1]} : vector<32x160xbf16> to vector<32x8xbf16>
    %121 = vector.extract_strided_slice %26 {offsets = [0, 128], sizes = [32, 32], strides = [1, 1]} : vector<32x160xbf16> to vector<32x32xbf16>
    %cst_31 = arith.constant dense<0.000000e+00> : vector<32x32xf32>
    %122 = tpu.matmul %119, %120, %cst_31 {dimension_numbers = #tpu.dot_dimension_numbers<[1], [1], [0], [0], [0, 0, 1, 0], [], []>} : vector<32x8xbf16>, vector<32x8xbf16>, vector<32x32xf32> -> vector<32x32xf32>
    %123 = arith.addf %122, %63 : vector<32x32xf32>
    %cst_32 = arith.constant dense<0xFF800000> : vector<32xf32>
    %124 = vector.multi_reduction <maximumf>, %123, %cst_32 [1] : vector<32x32xf32> to vector<32xf32>
    %125 = vector.shape_cast %124 : vector<32xf32> to vector<32x1xf32>
    %126 = vector.broadcast %125 : vector<32x1xf32> to vector<32x32xf32>
    %127 = arith.subf %123, %126 : vector<32x32xf32>
    %128 = math.exp %127 : vector<32x32xf32>
    %cst_33 = arith.constant dense<0.000000e+00> : vector<32xf32>
    %129 = vector.multi_reduction <add>, %128, %cst_33 [1] : vector<32x32xf32> to vector<32xf32>
    %130 = vector.shape_cast %129 : vector<32xf32> to vector<32x1xf32>
    %131 = tpu.reciprocal %130 {approx = true} : vector<32x1xf32> -> vector<32x1xf32>
    %132 = vector.broadcast %131 : vector<32x1xf32> to vector<32x32xf32>
    %133 = arith.mulf %128, %132 : vector<32x32xf32>
    %134 = arith.truncf %133 : vector<32x32xf32> to vector<32x32xbf16>
    %cst_34 = arith.constant dense<0.000000e+00> : vector<32x32xf32>
    %135 = tpu.matmul %134, %121, %cst_34 {dimension_numbers = #tpu.dot_dimension_numbers<[1], [0], [0], [1], [0, 0, 1, 1], [], []>} : vector<32x32xbf16>, vector<32x32xbf16>, vector<32x32xf32> -> vector<32x32xf32>
    %136 = arith.addf %118, %135 : vector<32x32xf32>
    %137 = vector.broadcast %8 : vector<1x32xf32> to vector<32x32xf32>
    %138 = arith.addf %136, %137 : vector<32x32xf32>
    %139 = arith.addf %5, %138 : vector<32x32xf32>
    %cst_35 = arith.constant dense<0.000000e+00> : vector<32xf32>
    %140 = vector.multi_reduction <add>, %139, %cst_35 [1] : vector<32x32xf32> to vector<32xf32>
    %141 = vector.shape_cast %140 : vector<32xf32> to vector<32x1xf32>
    %cst_36 = arith.constant 3.200000e+01 : f32
    %142 = vector.broadcast %cst_36 : f32 to vector<32x1xf32>
    %143 = arith.divf %141, %142 : vector<32x1xf32>
    %144 = vector.broadcast %143 : vector<32x1xf32> to vector<32x32xf32>
    %145 = arith.subf %139, %144 : vector<32x32xf32>
    %146 = arith.mulf %145, %145 : vector<32x32xf32>
    %cst_37 = arith.constant dense<0.000000e+00> : vector<32xf32>
    %147 = vector.multi_reduction <add>, %146, %cst_37 [1] : vector<32x32xf32> to vector<32xf32>
    %148 = vector.shape_cast %147 : vector<32xf32> to vector<32x1xf32>
    %cst_38 = arith.constant 3.200000e+01 : f32
    %149 = vector.broadcast %cst_38 : f32 to vector<32x1xf32>
    %150 = arith.divf %148, %149 : vector<32x1xf32>
    %151 = vector.broadcast %143 : vector<32x1xf32> to vector<32x32xf32>
    %152 = arith.subf %139, %151 : vector<32x32xf32>
    %cst_39 = arith.constant 9.99999974E-6 : f32
    %153 = vector.broadcast %cst_39 : f32 to vector<32x1xf32>
    %154 = arith.addf %150, %153 : vector<32x1xf32>
    %155 = math.rsqrt %154 : vector<32x1xf32>
    %156 = vector.broadcast %155 : vector<32x1xf32> to vector<32x32xf32>
    %157 = arith.mulf %152, %156 : vector<32x32xf32>
    %158 = vector.broadcast %11 : vector<1x32xf32> to vector<32x32xf32>
    %159 = arith.mulf %157, %158 : vector<32x32xf32>
    %160 = vector.broadcast %12 : vector<1x32xf32> to vector<32x32xf32>
    %161 = arith.addf %159, %160 : vector<32x32xf32>
    %162 = arith.truncf %161 : vector<32x32xf32> to vector<32x32xbf16>
    %c0_40 = arith.constant 0 : index
    %c0_41 = arith.constant 0 : index
    %163 = vector.load %arg5[%c0_40, %c0_41] : memref<32x64xbf16, #tpu.memory_space<vmem>>, vector<32x64xbf16>
    %cst_42 = arith.constant dense<0.000000e+00> : vector<32x64xf32>
    %164 = tpu.matmul %162, %163, %cst_42 {dimension_numbers = #tpu.dot_dimension_numbers<[1], [0], [0], [1], [0, 0, 1, 1], [], []>} : vector<32x32xbf16>, vector<32x64xbf16>, vector<32x64xf32> -> vector<32x64xf32>
    %165 = vector.broadcast %9 : vector<1x64xf32> to vector<32x64xf32>
    %166 = arith.addf %164, %165 : vector<32x64xf32>
    %cst_43 = arith.constant 0.000000e+00 : f32
    %167 = vector.broadcast %cst_43 : f32 to vector<32x64xf32>
    %168 = arith.maximumf %166, %167 : vector<32x64xf32>
    %169 = arith.truncf %168 : vector<32x64xf32> to vector<32x64xbf16>
    %c0_44 = arith.constant 0 : index
    %c0_45 = arith.constant 0 : index
    %170 = vector.load %arg6[%c0_44, %c0_45] : memref<64x32xbf16, #tpu.memory_space<vmem>>, vector<64x32xbf16>
    %cst_46 = arith.constant dense<0.000000e+00> : vector<32x32xf32>
    %171 = tpu.matmul %169, %170, %cst_46 {dimension_numbers = #tpu.dot_dimension_numbers<[1], [0], [0], [1], [0, 0, 1, 1], [], []>} : vector<32x64xbf16>, vector<64x32xbf16>, vector<32x32xf32> -> vector<32x32xf32>
    %172 = vector.broadcast %10 : vector<1x32xf32> to vector<32x32xf32>
    %173 = arith.addf %171, %172 : vector<32x32xf32>
    %174 = arith.addf %161, %173 : vector<32x32xf32>
    %cst_47 = arith.constant dense<0.000000e+00> : vector<32xf32>
    %175 = vector.multi_reduction <add>, %174, %cst_47 [1] : vector<32x32xf32> to vector<32xf32>
    %176 = vector.shape_cast %175 : vector<32xf32> to vector<32x1xf32>
    %cst_48 = arith.constant 3.200000e+01 : f32
    %177 = vector.broadcast %cst_48 : f32 to vector<32x1xf32>
    %178 = arith.divf %176, %177 : vector<32x1xf32>
    %179 = vector.broadcast %178 : vector<32x1xf32> to vector<32x32xf32>
    %180 = arith.subf %174, %179 : vector<32x32xf32>
    %181 = arith.mulf %180, %180 : vector<32x32xf32>
    %cst_49 = arith.constant dense<0.000000e+00> : vector<32xf32>
    %182 = vector.multi_reduction <add>, %181, %cst_49 [1] : vector<32x32xf32> to vector<32xf32>
    %183 = vector.shape_cast %182 : vector<32xf32> to vector<32x1xf32>
    %cst_50 = arith.constant 3.200000e+01 : f32
    %184 = vector.broadcast %cst_50 : f32 to vector<32x1xf32>
    %185 = arith.divf %183, %184 : vector<32x1xf32>
    %186 = vector.broadcast %178 : vector<32x1xf32> to vector<32x32xf32>
    %187 = arith.subf %174, %186 : vector<32x32xf32>
    %cst_51 = arith.constant 9.99999974E-6 : f32
    %188 = vector.broadcast %cst_51 : f32 to vector<32x1xf32>
    %189 = arith.addf %185, %188 : vector<32x1xf32>
    %190 = math.rsqrt %189 : vector<32x1xf32>
    %191 = vector.broadcast %190 : vector<32x1xf32> to vector<32x32xf32>
    %192 = arith.mulf %187, %191 : vector<32x32xf32>
    %193 = vector.broadcast %13 : vector<1x32xf32> to vector<32x32xf32>
    %194 = arith.mulf %192, %193 : vector<32x32xf32>
    %195 = vector.broadcast %14 : vector<1x32xf32> to vector<32x32xf32>
    %196 = arith.addf %194, %195 : vector<32x32xf32>
    %c0_52 = arith.constant 0 : index
    %c0_53 = arith.constant 0 : index
    %197 = vector.load %arg8[%c0_52, %c0_53] : memref<32x32xf32, #tpu.memory_space<vmem>>, vector<32x32xf32>
    tpu.vector_store %arg8[%c0_52, %c0_53], %196 {strides = array<i32>} : memref<32x32xf32, #tpu.memory_space<vmem>>, vector<32x32xf32>,
    return
  }
  func.func @transform_0(%arg0: i32, %arg1: memref<2xi32, #tpu.memory_space<smem>>) -> (i32, i32) {
    %c0_i32 = arith.constant 0 : i32
    %c0_i32_0 = arith.constant 0 : i32
    %c0_i32_1 = arith.constant 0 : i32
    return %c0_i32, %c0_i32_0 : i32, i32
  }
  func.func @transform_1(%arg0: i32, %arg1: memref<2xi32, #tpu.memory_space<smem>>) -> (i32, i32) {
    %c0_i32 = arith.constant 0 : i32
    %c0_i32_0 = arith.constant 0 : i32
    %c0_i32_1 = arith.constant 0 : i32
    return %c0_i32, %c0_i32_0 : i32, i32
  }
  func.func @transform_2(%arg0: i32, %arg1: memref<2xi32, #tpu.memory_space<smem>>) -> (i32, i32) {
    %c0_i32 = arith.constant 0 : i32
    %c0_i32_0 = arith.constant 0 : i32
    %c0_i32_1 = arith.constant 0 : i32
    return %c0_i32, %c0_i32_0 : i32, i32
  }
  func.func @transform_3(%arg0: i32, %arg1: memref<2xi32, #tpu.memory_space<smem>>) -> (i32, i32) {
    %c0_i32 = arith.constant 0 : i32
    %c0_i32_0 = arith.constant 0 : i32
    %c0_i32_1 = arith.constant 0 : i32
    return %c0_i32, %c0_i32_0 : i32, i32
  }
  func.func @transform_4(%arg0: i32, %arg1: memref<2xi32, #tpu.memory_space<smem>>) -> (i32, i32) {
    %c0_i32 = arith.constant 0 : i32
    %c0_i32_0 = arith.constant 0 : i32
    %c0_i32_1 = arith.constant 0 : i32
    return %c0_i32, %c0_i32_0 : i32, i32
  }
  func.func @transform_5(%arg0: i32, %arg1: memref<2xi32, #tpu.memory_space<smem>>) -> (i32, i32) {
    %c0_i32 = arith.constant 0 : i32
    %c0_i32_0 = arith.constant 0 : i32
    %c0_i32_1 = arith.constant 0 : i32
    return %c0_i32, %c0_i32_0 : i32, i32
  }
  func.func @transform_6(%arg0: i32, %arg1: memref<2xi32, #tpu.memory_space<smem>>) -> (i32, i32) {
    %c0_i32 = arith.constant 0 : i32
    %c0_i32_0 = arith.constant 0 : i32
    return %arg0, %c0_i32 : i32, i32
  }
}

</mosaic_0001>

<llo_original>
// kernel: tpu_custom_call.1
$region0: #{tpu_custom_call.1}
  #allocation0 [shape = 'u32[]', space=smem, size = 0x4, offset = 0x4, fixed_abs, tag = 'smem constant byte address 0x4 - core index']
  #allocation1 [shape = 'u32[144,128]{1,0:T(1,128)}', space=vmem, size = 0x12000, scoped, tag = 'internal scratch']
  #allocation2 [shape = 's32[1]{0}', space=sflag, size = 0x4, scoped, tag = 'scoped memory for tpu_custom_call.1']
  #allocation3 [shape = 'u8[512]{0}', space=smem, size = 0x200, scoped, tag = 'prefetched SMEM operand 0']
  %s0 = inlined_call_operand.vmem [shape: s32[2], index: 0, kind: input, shape index: {}]
  %s1 = inlined_call_operand.vmem [shape: f32[32,32], index: 1, kind: input, shape index: {}]
  %s2 = inlined_call_operand.hbm [shape: bf16[32,32], index: 2, kind: input, shape index: {}]
  %s3 = inlined_call_operand.hbm [shape: bf16[32,160], index: 3, kind: input, shape index: {}]
  %s4 = inlined_call_operand.hbm [shape: bf16[32,64], index: 4, kind: input, shape index: {}]
  %s5 = inlined_call_operand.vmem [shape: bf16[64,32], index: 5, kind: input, shape index: {}]
  %s6 = inlined_call_operand.vmem [shape: f32[16,160], index: 6, kind: input, shape index: {}]
  %s7 = inlined_call_operand.hbm [shape: f32[32,32], index: 7, kind: output, shape index: {}]
  %s8 = sld [smem:[#allocation0]]
  $region46: #{tpu_custom_call.1} parent=0
    _
  %s10 = ssub.s32 1, %s8
  %s11 = scalar_select 0, %s10, %s8
  %s12 = sshll.u32 %s0, 4
  %s13 = int_to_ptr.vmem [resolvable:$true] %s12
  %15 = dma.vmem_to_smem %s13, 16, [#allocation3], [#allocation2]
  %16 = dma.done [#allocation2], 16
  %17 = sfence
  $region1: #{tpu_custom_call.1} parent=0
    #allocation4 [shape = 'u8[8192]{0}', space=vmem, size = 0x2000, scoped, tag = 'input window, operand 2, single buffered']
    #allocation5 [shape = 's32[1]{0}', space=sflag, size = 0x4, scoped, tag = 'scoped memory for tpu_custom_call.1']
    #allocation6 [shape = 's32[1]{0}', space=sflag, size = 0x4, scoped, tag = 'scoped memory for tpu_custom_call.1']
    #allocation7 [shape = 'u8[16384]{0}', space=vmem, size = 0x4000, scoped, tag = 'input window, operand 3, single buffered']
    #allocation8 [shape = 's32[1]{0}', space=sflag, size = 0x4, scoped, tag = 'scoped memory for tpu_custom_call.1']
    #allocation9 [shape = 'u8[8192]{0}', space=vmem, size = 0x2000, scoped, tag = 'input window, operand 4, single buffered']
    #allocation10 [shape = 'u8[16384]{0}', space=vmem, size = 0x4000, scoped, tag = 'output window, operand 0, single buffered']
    %18 = vsyncpa [#allocation5], 0
    %19 = vsyncpa [#allocation8], 0
    %20 = vsyncpa [#allocation6], 0
    // Predicated region
    $region2: #{tpu_custom_call.1} parent=1 // pred_check
      _
    $region3: #{tpu_custom_call.1} parent=1 // pred_check_branch
      %22 = sbr.rel (0) target = $region5
    $region4: #{tpu_custom_call.1} parent=1 // pred_region
      _
    $region5: #{tpu_custom_call.1} parent=1 // pred_fallthru
      _
    // Predicated region
    $region6: #{tpu_custom_call.1} parent=1 // pred_check
      _
    $region7: #{tpu_custom_call.1} parent=1 // pred_check_branch
      %24 = sbr.rel (0) target = $region9
    $region8: #{tpu_custom_call.1} parent=1 // pred_region
      %s26 = ssub.s32 256, 256
      %27 = vsyncadd [#allocation5], %s26
      %s28 = sshll.u32 [#allocation4], 4
      %s29 = int_to_ptr.vmem [resolvable:$true] %s28
      %34 = dma.hbm_to_vmem [thread:$0]  %s2, 256, %s29, [#allocation5], 64, 64, 4
    $region9: #{tpu_custom_call.1} parent=1 // pred_fallthru
      _
    // Predicated region
    $region10: #{tpu_custom_call.1} parent=1 // pred_check
      _
    $region11: #{tpu_custom_call.1} parent=1 // pred_check_branch
      %36 = sbr.rel (0) target = $region13
    $region12: #{tpu_custom_call.1} parent=1 // pred_region
      %s38 = ssub.s32 512, 512
      %39 = vsyncadd [#allocation8], %s38
      %s40 = sshll.u32 [#allocation7], 4
      %s41 = int_to_ptr.vmem [resolvable:$true] %s40
      %46 = dma.hbm_to_vmem [thread:$0]  %s3, 512, %s41, [#allocation8], 128, 128, 8
    $region13: #{tpu_custom_call.1} parent=1 // pred_fallthru
      _
    // Predicated region
    $region14: #{tpu_custom_call.1} parent=1 // pred_check
      _
    $region15: #{tpu_custom_call.1} parent=1 // pred_check_branch
      %48 = sbr.rel (0) target = $region17
    $region16: #{tpu_custom_call.1} parent=1 // pred_region
      %s50 = ssub.s32 256, 256
      %51 = vsyncadd [#allocation8], %s50
      %s52 = sshll.u32 [#allocation9], 4
      %s53 = int_to_ptr.vmem [resolvable:$true] %s52
      %58 = dma.hbm_to_vmem [thread:$0]  %s4, 256, %s53, [#allocation8], 64, 64, 4
    $region17: #{tpu_custom_call.1} parent=1 // pred_fallthru
      _
    // Predicated region
    $region18: #{tpu_custom_call.1} parent=1 // pred_check
      _
    $region19: #{tpu_custom_call.1} parent=1 // pred_check_branch
      %60 = sbr.rel (0) target = $region21
    $region20: #{tpu_custom_call.1} parent=1 // pred_region
      _
    $region21: #{tpu_custom_call.1} parent=1 // pred_fallthru
      _
    // Predicated region
    $region22: #{tpu_custom_call.1} parent=1 // pred_check
      _
    $region23: #{tpu_custom_call.1} parent=1 // pred_check_branch
      %62 = sbr.rel (0) target = $region25
    $region24: #{tpu_custom_call.1} parent=1 // pred_region
      _
    $region25: #{tpu_custom_call.1} parent=1 // pred_fallthru
      _
    // Predicated region
    $region26: #{tpu_custom_call.1} parent=1 // pred_check
      _
    $region27: #{tpu_custom_call.1} parent=1 // pred_check_branch
      %64 = sbr.rel (0) target = $region29
    $region28: #{tpu_custom_call.1} parent=1 // pred_region
      %65 = dma.done [#allocation5], 256
    $region29: #{tpu_custom_call.1} parent=1 // pred_fallthru
      _
    // Predicated region
    $region30: #{tpu_custom_call.1} parent=1 // pred_check
      _
    $region31: #{tpu_custom_call.1} parent=1 // pred_check_branch
      %67 = sbr.rel (0) target = $region33
    $region32: #{tpu_custom_call.1} parent=1 // pred_region
      %68 = dma.done [#allocation8], 512
    $region33: #{tpu_custom_call.1} parent=1 // pred_fallthru
      _
    // Predicated region
    $region34: #{tpu_custom_call.1} parent=1 // pred_check
      _
    $region35: #{tpu_custom_call.1} parent=1 // pred_check_branch
      %70 = sbr.rel (0) target = $region37
    $region36: #{tpu_custom_call.1} parent=1 // pred_region
      %71 = dma.done [#allocation8], 256
    $region37: #{tpu_custom_call.1} parent=1 // pred_fallthru
      _
    %v73 = vld [vmem:[%s1] sm:$0xff]
    %v74 = vld [vmem:[%s1 + $0x8] sm:$0xff]
    %v75 = vld [vmem:[%s1 + $0x10] sm:$0xff]
    %v76 = vld [vmem:[%s1 + $0x18] sm:$0xff]
    %v77 = vld [vmem:[%s6] sm:$0xff]
    %v78 = vld [vmem:[%s6 + $0x8] sm:$0xff]
    %v79 = vld [vmem:[%s6 + $0x10] sm:$0xff]
    %s80 = smul.u32 0, 32
    %s81 = scalar_lea.vmem %s1, %s80
    %v82 = vld [vmem:[%s81] sm:$0xff]
    %v83 = vld [vmem:[%s81 + $0x8] sm:$0xff]
    %v84 = vld [vmem:[%s81 + $0x10] sm:$0xff]
    %v85 = vld [vmem:[%s81 + $0x18] sm:$0xff]
    %v86 = vpack.c.bf16 %v83, %v82
    %v87 = vpack.c.bf16 %v85, %v84
    %v88 = vld [vmem:[#allocation4] sm:$0xf]
    %v89 = vld [vmem:[#allocation4 + $0x4] sm:$0xf]
    %v90 = vld [vmem:[#allocation4 + $0x8] sm:$0xf]
    %v91 = vld [vmem:[#allocation4 + $0xc] sm:$0xf]
    %v92 = vlaneseq
    %v93 = vshrl.u32 %v92, 7
    %v94 = vsub.s32 0, %v93
    %v95 = vrot.slane %v77, %v94
    %v100 = vunpack.c.l.b16 %v88
    %v101 = vunpack.c.l.b16 %v89
    %v102 = vunpack.c.l.b16 %v90
    %v103 = vunpack.c.l.b16 %v91
    %v104 = vpack.c.b16 %v101, %v100
    %v105 = vpack.c.b16 %v103, %v102
    %vm108 = vcmask 261120
    %v110 = vsel %vm108, %v86, 0
    %v113 = vsel %vm108, %v87, 0
    %115 = vmatprep.subr.bf16.mxu0 0
    %116 = vmatpush1.bf16.msra.mxu0 %v104
    %117 = vmatprep.subr.bf16.mxu0 0
    %118 = vmatpush1.bf16.msra.mxu0 %v105
    %119 = vmatprep.subr.bf16.mxu0 0
    %120 = vmatpush1.bf16.msra.mxu0 0
    %121 = vmatprep.subr.bf16.mxu0 0
    %122 = vmatpush1.bf16.msra.mxu0 0
    %123 = vmatprep.subr.bf16.mxu0 0
    %124 = vmatpush1.bf16.msra.mxu0 0
    %125 = vmatprep.subr.bf16.mxu0 0
    %126 = vmatpush1.bf16.msra.mxu0 0
    %127 = vmatprep.subr.bf16.mxu0 0
    %128 = vmatpush1.bf16.msra.mxu0 0
    %129 = vmatprep.subr.bf16.mxu0 0
    %130 = vmatpush1.bf16.msra.mxu0 0
    %131 = vmatprep.subr.bf16.mxu0 0
    %132 = vmatpush1.bf16.msra.mxu0 0
    %133 = vmatprep.subr.bf16.mxu0 0
    %134 = vmatpush1.bf16.msra.mxu0 0
    %135 = vmatprep.subr.bf16.mxu0 0
    %136 = vmatpush1.bf16.msra.mxu0 0
    %137 = vmatprep.subr.bf16.mxu0 0
    %138 = vmatpush1.bf16.msra.mxu0 0
    %139 = vmatprep.subr.bf16.mxu0 0
    %140 = vmatpush1.bf16.msra.mxu0 0
    %141 = vmatprep.subr.bf16.mxu0 0
    %142 = vmatpush1.bf16.msra.mxu0 0
    %143 = vmatprep.subr.bf16.mxu0 0
    %144 = vmatpush1.bf16.msra.mxu0 0
    %145 = vmatprep.subr.bf16.mxu0 0
    %146 = vmatpush1.bf16.msra.mxu0 0
    %147 = vmatprep.mubr.bf16.mxu0 0
    %148 = vmatmul.mubr.bf16.gmra.mrb[0].mxu0 %v110
    %v149 = vpop.f32.mrb[0].mxu0
    %v150 = vadd.f32 %v95, %v149
    %v151 = vpop.f32.mrb[0].mxu0
    %v152 = vpop.f32.mrb[0].mxu0
    %v153 = vadd.f32 %v95, %v152
    %v154 = vpop.f32.mrb[0].mxu0
    %155 = vmatprep.mubr.bf16.mxu0 0
    %156 = vmatmul.mubr.bf16.gmra.mrb[0].mxu0 %v113
    %v157 = vpop.f32.mrb[0].mxu0
    %v158 = vadd.f32 %v95, %v157
    %v159 = vpop.f32.mrb[0].mxu0
    %v160 = vpop.f32.mrb[0].mxu0
    %v161 = vadd.f32 %v95, %v160
    %v162 = vpop.f32.mrb[0].mxu0
    %163 = vdwg.mxu0
    %v164 = vpack.c.bf16 %v74, %v73
    %v165 = vpack.c.bf16 %v76, %v75
    %v166 = vld [vmem:[#allocation7] sm:$0xff]
    %v167 = vld [vmem:[#allocation7 + $0x8] sm:$0xff]
    %v168 = vld [vmem:[#allocation7 + $0x10] sm:$0xff]
    %v169 = vld [vmem:[#allocation7 + $0x18] sm:$0xff]
    %v170 = vlaneseq
    %v171 = vshrl.u32 %v170, 7
    %v172 = vsub.s32 1, %v171
    %v173 = vrot.slane %v77, %v172
    %v174 = vlaneseq
    %v175 = vshrl.u32 %v174, 7
    %v176 = vsub.s32 1, %v175
    %v177 = vrot.slane %v78, %v176
    %v182 = vunpack.c.l.b16 %v166
    %v183 = vunpack.c.h.b16 %v166
    %v184 = vunpack.c.l.b16 %v167
    %v185 = vunpack.c.h.b16 %v167
    %v186 = vunpack.c.l.b16 %v168
    %v187 = vunpack.c.h.b16 %v168
    %v188 = vunpack.c.l.b16 %v169
    %v189 = vunpack.c.h.b16 %v169
    %v190 = vpack.c.b16 %v184, %v182
    %v191 = vpack.c.b16 %v185, %v183
    %v192 = vpack.c.b16 %v188, %v186
    %v193 = vpack.c.b16 %v189, %v187
    %v199 = vsel %vm108, %v164, 0
    %v202 = vsel %vm108, %v165, 0
    %204 = vmatprep.subr.bf16.mxu0 %v191
    %205 = vmatpush1.bf16.msra.mxu0 %v190
    %206 = vmatprep.subr.bf16.mxu0 %v193
    %207 = vmatpush1.bf16.msra.mxu0 %v192
    %208 = vmatprep.subr.bf16.mxu0 0
    %209 = vmatpush1.bf16.msra.mxu0 0
    %210 = vmatprep.subr.bf16.mxu0 0
    %211 = vmatpush1.bf16.msra.mxu0 0
    %212 = vmatprep.subr.bf16.mxu0 0
    %213 = vmatpush1.bf16.msra.mxu0 0
    %214 = vmatprep.subr.bf16.mxu0 0
    %215 = vmatpush1.bf16.msra.mxu0 0
    %216 = vmatprep.subr.bf16.mxu0 0
    %217 = vmatpush1.bf16.msra.mxu0 0
    %218 = vmatprep.subr.bf16.mxu0 0
    %219 = vmatpush1.bf16.msra.mxu0 0
    %220 = vmatprep.subr.bf16.mxu0 0
    %221 = vmatpush1.bf16.msra.mxu0 0
    %222 = vmatprep.subr.bf16.mxu0 0
    %223 = vmatpush1.bf16.msra.mxu0 0
    %224 = vmatprep.subr.bf16.mxu0 0
    %225 = vmatpush1.bf16.msra.mxu0 0
    %226 = vmatprep.subr.bf16.mxu0 0
    %227 = vmatpush1.bf16.msra.mxu0 0
    %228 = vmatprep.subr.bf16.mxu0 0
    %229 = vmatpush1.bf16.msra.mxu0 0
    %230 = vmatprep.subr.bf16.mxu0 0
    %231 = vmatpush1.bf16.msra.mxu0 0
    %232 = vmatprep.subr.bf16.mxu0 0
    %233 = vmatpush1.bf16.msra.mxu0 0
    %234 = vmatprep.subr.bf16.mxu0 0
    %235 = vmatpush1.bf16.msra.mxu0 0
    %236 = vmatprep.mubr.bf16.mxu0 0
    %237 = vmatmul.mubr.bf16.gmra.mrb[0].mxu0 %v199
    %v238 = vpop.f32.mrb[0].mxu0
    %v239 = vadd.f32 %v173, %v238
    %v240 = vpop.f32.mrb[0].mxu0
    %v241 = vadd.f32 %v177, %v240
    %v242 = vpop.f32.mrb[0].mxu0
    %v243 = vadd.f32 %v173, %v242
    %v244 = vpop.f32.mrb[0].mxu0
    %v245 = vadd.f32 %v177, %v244
    %246 = vmatprep.mubr.bf16.mxu0 0
    %247 = vmatmul.mubr.bf16.gmra.mrb[0].mxu0 %v202
    %v248 = vpop.f32.mrb[0].mxu0
    %v249 = vadd.f32 %v173, %v248
    %v250 = vpop.f32.mrb[0].mxu0
    %v251 = vadd.f32 %v177, %v250
    %v252 = vpop.f32.mrb[0].mxu0
    %v253 = vadd.f32 %v173, %v252
    %v254 = vpop.f32.mrb[0].mxu0
    %v255 = vadd.f32 %v177, %v254
    %256 = vdwg.mxu0
    %v257 = vpack.c.bf16 %v153, %v150
    %v258 = vpack.c.bf16 %v161, %v158
    %v259 = vpack.c.bf16 %v243, %v239
    %v260 = vpack.c.bf16 %v245, %v241
    %v261 = vpack.c.bf16 %v253, %v249
    %v262 = vpack.c.bf16 %v255, %v251
    %v263 = vlaneseq
    %v264 = vshrl.u32 %v263, 7
    %v265 = vadd.s32 %v264, 8
    %v266 = vadd.s32 %v264, 16
    %v267 = vadd.s32 %v264, 24
    %v268 = vstv %s80
    %v269 = vadd.s32 %v264, %v268
    %v270 = vadd.s32 %v265, %v268
    %v271 = vadd.s32 %v266, %v268
    %v272 = vadd.s32 %v267, %v268
    %v273 = vlaneseq
    %v274 = vand.u32 %v273, 127
    %vm275 = vcmp.ge.s32.totalorder %v269, 26
    %vm276 = vcmp.ge.s32.totalorder %v270, 26
    %vm277 = vcmp.ge.s32.totalorder %v271, 26
    %vm278 = vcmp.ge.s32.totalorder %v272, 26
    %vm279 = vcmp.ge.s32.totalorder %v269, 0
    %vm280 = vcmp.ge.s32.totalorder %v270, 0
    %vm281 = vcmp.ge.s32.totalorder %v271, 0
    %vm282 = vcmp.ge.s32.totalorder %v272, 0
    %vm283 = vcmp.lt.s32.totalorder %v269, 13
    %vm284 = vcmp.lt.s32.totalorder %v270, 13
    %vm285 = vcmp.lt.s32.totalorder %v271, 13
    %vm286 = vcmp.lt.s32.totalorder %v272, 13
    %vm287 = vmand %vm279, %vm283
    %vm288 = vmand %vm280, %vm284
    %vm289 = vmand %vm281, %vm285
    %vm290 = vmand %vm282, %vm286
    %vm291 = vcmp.ge.s32.totalorder %v274, 0
    %s292 = sld [smem:[#allocation3]]
    %v293 = vstv %s292
    %vm294 = vcmp.lt.s32.totalorder %v274, %v293
    %vm295 = vmand %vm291, %vm294
    %vm296 = vmand %vm287, %vm295
    %vm297 = vmand %vm288, %vm295
    %vm298 = vmand %vm289, %vm295
    %vm299 = vmand %vm290, %vm295
    %vm300 = vmor %vm275, %vm296
    %vm301 = vmor %vm276, %vm297
    %vm302 = vmor %vm277, %vm298
    %vm303 = vmor %vm278, %vm299
    %vm304 = vcmp.ge.s32.totalorder %v269, 13
    %vm305 = vcmp.ge.s32.totalorder %v270, 13
    %vm306 = vcmp.ge.s32.totalorder %v271, 13
    %vm307 = vcmp.ge.s32.totalorder %v272, 13
    %vm308 = vcmp.lt.s32.totalorder %v269, 26
    %vm309 = vcmp.lt.s32.totalorder %v270, 26
    %vm310 = vcmp.lt.s32.totalorder %v271, 26
    %vm311 = vcmp.lt.s32.totalorder %v272, 26
    %vm312 = vmand %vm304, %vm308
    %vm313 = vmand %vm305, %vm309
    %vm314 = vmand %vm306, %vm310
    %vm315 = vmand %vm307, %vm311
    %vm316 = vcmp.ge.s32.totalorder %v274, 13
    %s317 = sld [smem:[#allocation3 + $0x1]]
    %s318 = sadd.s32 %s317, 13
    %v319 = vstv %s318
    %vm320 = vcmp.lt.s32.totalorder %v274, %v319
    %vm321 = vmand %vm316, %vm320
    %vm322 = vmand %vm312, %vm321
    %vm323 = vmand %vm313, %vm321
    %vm324 = vmand %vm314, %vm321
    %vm325 = vmand %vm315, %vm321
    %vm326 = vmor %vm300, %vm322
    %vm327 = vmor %vm301, %vm323
    %vm328 = vmor %vm302, %vm324
    %vm329 = vmor %vm303, %vm325
    %v330 = vsel %vm326, 0.0, -1e+09
    %v331 = vsel %vm327, 0.0, -1e+09
    %v332 = vsel %vm328, 0.0, -1e+09
    %v333 = vsel %vm329, 0.0, -1e+09
    %vm334 = vcmask 64512
    %v336 = vsel %vm334, %v257, 0
    %v339 = vsel %vm334, %v258, 0
    %v342 = vsel %vm334, %v259, 0
    %v345 = vsel %vm334, %v261, 0
    %347 = vmatprep.subr.bf16.mxu0 0
    %348 = vmatpush1.bf16.xpose.msra.mxu0 %v342
    %349 = vmatprep.subr.bf16.mxu0 0
    %350 = vmatpush1.bf16.xpose.msra.mxu0 %v345
    %351 = vmatprep.subr.bf16.mxu0 0
    %352 = vmatpush1.bf16.xpose.msra.mxu0 0
    %353 = vmatprep.subr.bf16.mxu0 0
    %354 = vmatpush1.bf16.xpose.msra.mxu0 0
    %355 = vmatprep.subr.bf16.mxu0 0
    %356 = vmatpush1.bf16.xpose.msra.mxu0 0
    %357 = vmatprep.subr.bf16.mxu0 0
    %358 = vmatpush1.bf16.xpose.msra.mxu0 0
    %359 = vmatprep.subr.bf16.mxu0 0
    %360 = vmatpush1.bf16.xpose.msra.mxu0 0
    %361 = vmatprep.subr.bf16.mxu0 0
    %362 = vmatpush1.bf16.xpose.msra.mxu0 0
    %363 = vmatprep.subr.bf16.mxu0 0
    %364 = vmatpush1.bf16.xpose.msra.mxu0 0
    %365 = vmatprep.subr.bf16.mxu0 0
    %366 = vmatpush1.bf16.xpose.msra.mxu0 0
    %367 = vmatprep.subr.bf16.mxu0 0
    %368 = vmatpush1.bf16.xpose.msra.mxu0 0
    %369 = vmatprep.subr.bf16.mxu0 0
    %370 = vmatpush1.bf16.xpose.msra.mxu0 0
    %371 = vmatprep.subr.bf16.mxu0 0
    %372 = vmatpush1.bf16.xpose.msra.mxu0 0
    %373 = vmatprep.subr.bf16.mxu0 0
    %374 = vmatpush1.bf16.xpose.msra.mxu0 0
    %375 = vmatprep.subr.bf16.mxu0 0
    %376 = vmatpush1.bf16.xpose.msra.mxu0 0
    %377 = vmatprep.subr.bf16.mxu0 0
    %378 = vmatpush1.bf16.xpose.msra.mxu0 0
    %379 = vmatprep.mubr.bf16.mxu0 0
    %380 = vmatmul.mubr.bf16.gmra.mrb[0].mxu0 %v336
    %v381 = vpop.f32.mrb[0].mxu0
    %v382 = vadd.f32 %v330, %v381
    %v383 = vpop.f32.mrb[0].mxu0
    %v384 = vpop.f32.mrb[0].mxu0
    %v385 = vadd.f32 %v331, %v384
    %v386 = vpop.f32.mrb[0].mxu0
    %387 = vmatprep.mubr.bf16.mxu0 0
    %388 = vmatmul.mubr.bf16.gmra.mrb[0].mxu0 %v339
    %v389 = vpop.f32.mrb[0].mxu0
    %v390 = vadd.f32 %v332, %v389
    %v391 = vpop.f32.mrb[0].mxu0
    %v392 = vpop.f32.mrb[0].mxu0
    %v393 = vadd.f32 %v333, %v392
    %v394 = vpop.f32.mrb[0].mxu0
    %395 = vdwg.mxu0
    %v396 = vsel %vm108, %v382, -inf
    %397 = vmax.xlane.f32.xlu0 %v396
    %v398 = vpop.xlane.xlu0 %397
    %v399 = vsel %vm108, %v385, -inf
    %400 = vmax.xlane.f32.xlu0 %v399
    %v401 = vpop.xlane.xlu0 %400
    %v402 = vsel %vm108, %v390, -inf
    %403 = vmax.xlane.f32.xlu0 %v402
    %v404 = vpop.xlane.xlu0 %403
    %v405 = vsel %vm108, %v393, -inf
    %406 = vmax.xlane.f32.xlu0 %v405
    %v407 = vpop.xlane.xlu0 %406
    %v408 = vsub.f32 %v382, %v398
    %v409 = vsub.f32 %v385, %v401
    %v410 = vsub.f32 %v390, %v404
    %v411 = vsub.f32 %v393, %v407
    %v412 = vmul.f32 %v408, 1.442695
    %v413 = vpow.pop %v412
    %v414 = vmul.f32 %v409, 1.442695
    %v415 = vpow.pop %v414
    %v416 = vmul.f32 %v410, 1.442695
    %v417 = vpow.pop %v416
    %v418 = vmul.f32 %v411, 1.442695
    %v419 = vpow.pop %v418
    %v420 = vsel %vm108, %v413, 0.0
    %421 = vadd.xlane.f32.xlu0 %v420
    %v422 = vpop.xlane.xlu0 %421
    %v423 = vsel %vm108, %v415, 0.0
    %424 = vadd.xlane.f32.xlu0 %v423
    %v425 = vpop.xlane.xlu0 %424
    %v426 = vsel %vm108, %v417, 0.0
    %427 = vadd.xlane.f32.xlu0 %v426
    %v428 = vpop.xlane.xlu0 %427
    %v429 = vsel %vm108, %v419, 0.0
    %430 = vadd.xlane.f32.xlu0 %v429
    %v431 = vpop.xlane.xlu0 %430
    %v432 = vrcp.pop %v422
    %v433 = vrcp.pop %v425
    %v434 = vrcp.pop %v428
    %v435 = vrcp.pop %v431
    %v436 = vmul.f32 %v413, %v432
    %v437 = vmul.f32 %v415, %v433
    %v438 = vmul.f32 %v417, %v434
    %v439 = vmul.f32 %v419, %v435
    %v440 = vpack.c.bf16 %v437, %v436
    %v441 = vpack.c.bf16 %v439, %v438
    %444 = vrot.lane.b32.xlu0 %v257, 120
    %v445 = vpop.permute.xlu0 %444
    %446 = vrot.lane.b32.xlu0 %v258, 120
    %v447 = vpop.permute.xlu0 %446
    %450 = vrot.lane.b32.xlu0 %v259, 120
    %v451 = vpop.permute.xlu0 %450
    %452 = vrot.lane.b32.xlu0 %v261, 120
    %v453 = vpop.permute.xlu0 %452
    %v455 = vsel %vm334, %v445, 0
    %v458 = vsel %vm334, %v447, 0
    %v461 = vsel %vm334, %v451, 0
    %v464 = vsel %vm334, %v453, 0
    %466 = vmatprep.subr.bf16.mxu0 0
    %467 = vmatpush1.bf16.xpose.msra.mxu0 %v461
    %468 = vmatprep.subr.bf16.mxu0 0
    %469 = vmatpush1.bf16.xpose.msra.mxu0 %v464
    %470 = vmatprep.subr.bf16.mxu0 0
    %471 = vmatpush1.bf16.xpose.msra.mxu0 0
    %472 = vmatprep.subr.bf16.mxu0 0
    %473 = vmatpush1.bf16.xpose.msra.mxu0 0
    %474 = vmatprep.subr.bf16.mxu0 0
    %475 = vmatpush1.bf16.xpose.msra.mxu0 0
    %476 = vmatprep.subr.bf16.mxu0 0
    %477 = vmatpush1.bf16.xpose.msra.mxu0 0
    %478 = vmatprep.subr.bf16.mxu0 0
    %479 = vmatpush1.bf16.xpose.msra.mxu0 0
    %480 = vmatprep.subr.bf16.mxu0 0
    %481 = vmatpush1.bf16.xpose.msra.mxu0 0
    %482 = vmatprep.subr.bf16.mxu0 0
    %483 = vmatpush1.bf16.xpose.msra.mxu0 0
    %484 = vmatprep.subr.bf16.mxu0 0
    %485 = vmatpush1.bf16.xpose.msra.mxu0 0
    %486 = vmatprep.subr.bf16.mxu0 0
    %487 = vmatpush1.bf16.xpose.msra.mxu0 0
    %488 = vmatprep.subr.bf16.mxu0 0
    %489 = vmatpush1.bf16.xpose.msra.mxu0 0
    %490 = vmatprep.subr.bf16.mxu0 0
    %491 = vmatpush1.bf16.xpose.msra.mxu0 0
    %492 = vmatprep.subr.bf16.mxu0 0
    %493 = vmatpush1.bf16.xpose.msra.mxu0 0
    %494 = vmatprep.subr.bf16.mxu0 0
    %495 = vmatpush1.bf16.xpose.msra.mxu0 0
    %496 = vmatprep.subr.bf16.mxu0 0
    %497 = vmatpush1.bf16.xpose.msra.mxu0 0
    %498 = vmatprep.mubr.bf16.mxu0 0
    %499 = vmatmul.mubr.bf16.gmra.mrb[0].mxu0 %v455
    %v500 = vpop.f32.mrb[0].mxu0
    %v501 = vadd.f32 %v330, %v500
    %v502 = vpop.f32.mrb[0].mxu0
    %v503 = vpop.f32.mrb[0].mxu0
    %v504 = vadd.f32 %v331, %v503
    %v505 = vpop.f32.mrb[0].mxu0
    %506 = vmatprep.mubr.bf16.mxu0 0
    %507 = vmatmul.mubr.bf16.gmra.mrb[0].mxu0 %v458
    %v508 = vpop.f32.mrb[0].mxu0
    %v509 = vadd.f32 %v332, %v508
    %v510 = vpop.f32.mrb[0].mxu0
    %v511 = vpop.f32.mrb[0].mxu0
    %v512 = vadd.f32 %v333, %v511
    %v513 = vpop.f32.mrb[0].mxu0
    %514 = vdwg.mxu0
    %v515 = vsel %vm108, %v501, -inf
    %516 = vmax.xlane.f32.xlu0 %v515
    %v517 = vpop.xlane.xlu0 %516
    %v518 = vsel %vm108, %v504, -inf
    %519 = vmax.xlane.f32.xlu0 %v518
    %v520 = vpop.xlane.xlu0 %519
    %v521 = vsel %vm108, %v509, -inf
    %522 = vmax.xlane.f32.xlu0 %v521
    %v523 = vpop.xlane.xlu0 %522
    %v524 = vsel %vm108, %v512, -inf
    %525 = vmax.xlane.f32.xlu0 %v524
    %v526 = vpop.xlane.xlu0 %525
    %v527 = vsub.f32 %v501, %v517
    %v528 = vsub.f32 %v504, %v520
    %v529 = vsub.f32 %v509, %v523
    %v530 = vsub.f32 %v512, %v526
    %v531 = vmul.f32 %v527, 1.442695
    %v532 = vpow.pop %v531
    %v533 = vmul.f32 %v528, 1.442695
    %v534 = vpow.pop %v533
    %v535 = vmul.f32 %v529, 1.442695
    %v536 = vpow.pop %v535
    %v537 = vmul.f32 %v530, 1.442695
    %v538 = vpow.pop %v537
    %v539 = vsel %vm108, %v532, 0.0
    %540 = vadd.xlane.f32.xlu0 %v539
    %v541 = vpop.xlane.xlu0 %540
    %v542 = vsel %vm108, %v534, 0.0
    %543 = vadd.xlane.f32.xlu0 %v542
    %v544 = vpop.xlane.xlu0 %543
    %v545 = vsel %vm108, %v536, 0.0
    %546 = vadd.xlane.f32.xlu0 %v545
    %v547 = vpop.xlane.xlu0 %546
    %v548 = vsel %vm108, %v538, 0.0
    %549 = vadd.xlane.f32.xlu0 %v548
    %v550 = vpop.xlane.xlu0 %549
    %v551 = vrcp.pop %v541
    %v552 = vrcp.pop %v544
    %v553 = vrcp.pop %v547
    %v554 = vrcp.pop %v550
    %v555 = vmul.f32 %v532, %v551
    %v556 = vmul.f32 %v534, %v552
    %v557 = vmul.f32 %v536, %v553
    %v558 = vmul.f32 %v538, %v554
    %v559 = vpack.c.bf16 %v556, %v555
    %v560 = vpack.c.bf16 %v558, %v557
    %561 = vrot.lane.b32.xlu0 %v259, 64
    %v562 = vpop.permute.xlu0 %561
    %563 = vrot.lane.b32.xlu0 %v261, 64
    %v564 = vpop.permute.xlu0 %563
    %v568 = vsel %vm108, %v559, 0
    %v571 = vsel %vm108, %v560, 0
    %573 = vmatprep.subr.bf16.mxu0 0
    %574 = vmatpush1.bf16.msra.mxu0 %v562
    %575 = vmatprep.subr.bf16.mxu0 0
    %576 = vmatpush1.bf16.msra.mxu0 %v564
    %577 = vmatprep.subr.bf16.mxu0 0
    %578 = vmatpush1.bf16.msra.mxu0 0
    %579 = vmatprep.subr.bf16.mxu0 0
    %580 = vmatpush1.bf16.msra.mxu0 0
    %581 = vmatprep.subr.bf16.mxu0 0
    %582 = vmatpush1.bf16.msra.mxu0 0
    %583 = vmatprep.subr.bf16.mxu0 0
    %584 = vmatpush1.bf16.msra.mxu0 0
    %585 = vmatprep.subr.bf16.mxu0 0
    %586 = vmatpush1.bf16.msra.mxu0 0
    %587 = vmatprep.subr.bf16.mxu0 0
    %588 = vmatpush1.bf16.msra.mxu0 0
    %589 = vmatprep.subr.bf16.mxu0 0
    %590 = vmatpush1.bf16.msra.mxu0 0
    %591 = vmatprep.subr.bf16.mxu0 0
    %592 = vmatpush1.bf16.msra.mxu0 0
    %593 = vmatprep.subr.bf16.mxu0 0
    %594 = vmatpush1.bf16.msra.mxu0 0
    %595 = vmatprep.subr.bf16.mxu0 0
    %596 = vmatpush1.bf16.msra.mxu0 0
    %597 = vmatprep.subr.bf16.mxu0 0
    %598 = vmatpush1.bf16.msra.mxu0 0
    %599 = vmatprep.subr.bf16.mxu0 0
    %600 = vmatpush1.bf16.msra.mxu0 0
    %601 = vmatprep.subr.bf16.mxu0 0
    %602 = vmatpush1.bf16.msra.mxu0 0
    %603 = vmatprep.subr.bf16.mxu0 0
    %604 = vmatpush1.bf16.msra.mxu0 0
    %605 = vmatprep.mubr.bf16.mxu0 0
    %606 = vmatmul.mubr.bf16.gmra.mrb[0].mxu0 %v568
    %v607 = vpop.f32.mrb[0].mxu0
    %v608 = vadd.f32 0.0, %v607
    %v609 = vpop.f32.mrb[0].mxu0
    %v610 = vpop.f32.mrb[0].mxu0
    %v611 = vadd.f32 0.0, %v610
    %v612 = vpop.f32.mrb[0].mxu0
    %613 = vmatprep.mubr.bf16.mxu0 0
    %614 = vmatmul.mubr.bf16.gmra.mrb[0].mxu0 %v571
    %v615 = vpop.f32.mrb[0].mxu0
    %v616 = vadd.f32 0.0, %v615
    %v617 = vpop.f32.mrb[0].mxu0
    %v618 = vpop.f32.mrb[0].mxu0
    %v619 = vadd.f32 0.0, %v618
    %v620 = vpop.f32.mrb[0].mxu0
    %621 = vdwg.mxu0
    %622 = vrot.lane.b32.xlu0 %v259, 96
    %v623 = vpop.permute.xlu0 %622
    %624 = vrot.lane.b32.xlu0 %v261, 96
    %v625 = vpop.permute.xlu0 %624
    %v629 = vsel %vm108, %v440, 0
    %v632 = vsel %vm108, %v441, 0
    %634 = vmatprep.subr.bf16.mxu0 0
    %635 = vmatpush1.bf16.msra.mxu0 %v623
    %636 = vmatprep.subr.bf16.mxu0 0
    %637 = vmatpush1.bf16.msra.mxu0 %v625
    %638 = vmatprep.subr.bf16.mxu0 0
    %639 = vmatpush1.bf16.msra.mxu0 0
    %640 = vmatprep.subr.bf16.mxu0 0
    %641 = vmatpush1.bf16.msra.mxu0 0
    %642 = vmatprep.subr.bf16.mxu0 0
    %643 = vmatpush1.bf16.msra.mxu0 0
    %644 = vmatprep.subr.bf16.mxu0 0
    %645 = vmatpush1.bf16.msra.mxu0 0
    %646 = vmatprep.subr.bf16.mxu0 0
    %647 = vmatpush1.bf16.msra.mxu0 0
    %648 = vmatprep.subr.bf16.mxu0 0
    %649 = vmatpush1.bf16.msra.mxu0 0
    %650 = vmatprep.subr.bf16.mxu0 0
    %651 = vmatpush1.bf16.msra.mxu0 0
    %652 = vmatprep.subr.bf16.mxu0 0
    %653 = vmatpush1.bf16.msra.mxu0 0
    %654 = vmatprep.subr.bf16.mxu0 0
    %655 = vmatpush1.bf16.msra.mxu0 0
    %656 = vmatprep.subr.bf16.mxu0 0
    %657 = vmatpush1.bf16.msra.mxu0 0
    %658 = vmatprep.subr.bf16.mxu0 0
    %659 = vmatpush1.bf16.msra.mxu0 0
    %660 = vmatprep.subr.bf16.mxu0 0
    %661 = vmatpush1.bf16.msra.mxu0 0
    %662 = vmatprep.subr.bf16.mxu0 0
    %663 = vmatpush1.bf16.msra.mxu0 0
    %664 = vmatprep.subr.bf16.mxu0 0
    %665 = vmatpush1.bf16.msra.mxu0 0
    %666 = vmatprep.mubr.bf16.mxu0 0
    %667 = vmatmul.mubr.bf16.gmra.mrb[0].mxu0 %v629
    %v668 = vpop.f32.mrb[0].mxu0
    %v669 = vadd.f32 %v608, %v668
    %v670 = vpop.f32.mrb[0].mxu0
    %v671 = vpop.f32.mrb[0].mxu0
    %v672 = vadd.f32 %v611, %v671
    %v673 = vpop.f32.mrb[0].mxu0
    %674 = vmatprep.mubr.bf16.mxu0 0
    %675 = vmatmul.mubr.bf16.gmra.mrb[0].mxu0 %v632
    %v676 = vpop.f32.mrb[0].mxu0
    %v677 = vadd.f32 %v616, %v676
    %v678 = vpop.f32.mrb[0].mxu0
    %v679 = vpop.f32.mrb[0].mxu0
    %v680 = vadd.f32 %v619, %v679
    %v681 = vpop.f32.mrb[0].mxu0
    %682 = vdwg.mxu0
    %683 = vrot.lane.b32.xlu0 %v257, 112
    %v684 = vpop.permute.xlu0 %683
    %685 = vrot.lane.b32.xlu0 %v258, 112
    %v686 = vpop.permute.xlu0 %685
    %687 = vrot.lane.b32.xlu0 %v259, 112
    %v688 = vpop.permute.xlu0 %687
    %689 = vrot.lane.b32.xlu0 %v261, 112
    %v690 = vpop.permute.xlu0 %689
    %v692 = vsel %vm334, %v684, 0
    %v695 = vsel %vm334, %v686, 0
    %v698 = vsel %vm334, %v688, 0
    %v701 = vsel %vm334, %v690, 0
    %703 = vmatprep.subr.bf16.mxu0 0
    %704 = vmatpush1.bf16.xpose.msra.mxu0 %v698
    %705 = vmatprep.subr.bf16.mxu0 0
    %706 = vmatpush1.bf16.xpose.msra.mxu0 %v701
    %707 = vmatprep.subr.bf16.mxu0 0
    %708 = vmatpush1.bf16.xpose.msra.mxu0 0
    %709 = vmatprep.subr.bf16.mxu0 0
    %710 = vmatpush1.bf16.xpose.msra.mxu0 0
    %711 = vmatprep.subr.bf16.mxu0 0
    %712 = vmatpush1.bf16.xpose.msra.mxu0 0
    %713 = vmatprep.subr.bf16.mxu0 0
    %714 = vmatpush1.bf16.xpose.msra.mxu0 0
    %715 = vmatprep.subr.bf16.mxu0 0
    %716 = vmatpush1.bf16.xpose.msra.mxu0 0
    %717 = vmatprep.subr.bf16.mxu0 0
    %718 = vmatpush1.bf16.xpose.msra.mxu0 0
    %719 = vmatprep.subr.bf16.mxu0 0
    %720 = vmatpush1.bf16.xpose.msra.mxu0 0
    %721 = vmatprep.subr.bf16.mxu0 0
    %722 = vmatpush1.bf16.xpose.msra.mxu0 0
    %723 = vmatprep.subr.bf16.mxu0 0
    %724 = vmatpush1.bf16.xpose.msra.mxu0 0
    %725 = vmatprep.subr.bf16.mxu0 0
    %726 = vmatpush1.bf16.xpose.msra.mxu0 0
    %727 = vmatprep.subr.bf16.mxu0 0
    %728 = vmatpush1.bf16.xpose.msra.mxu0 0
    %729 = vmatprep.subr.bf16.mxu0 0
    %730 = vmatpush1.bf16.xpose.msra.mxu0 0
    %731 = vmatprep.subr.bf16.mxu0 0
    %732 = vmatpush1.bf16.xpose.msra.mxu0 0
    %733 = vmatprep.subr.bf16.mxu0 0
    %734 = vmatpush1.bf16.xpose.msra.mxu0 0
    %735 = vmatprep.mubr.bf16.mxu0 0
    %736 = vmatmul.mubr.bf16.gmra.mrb[0].mxu0 %v692
    %v737 = vpop.f32.mrb[0].mxu0
    %v738 = vadd.f32 %v330, %v737
    %v739 = vpop.f32.mrb[0].mxu0
    %v740 = vpop.f32.mrb[0].mxu0
    %v741 = vadd.f32 %v331, %v740
    %v742 = vpop.f32.mrb[0].mxu0
    %743 = vmatprep.mubr.bf16.mxu0 0
    %744 = vmatmul.mubr.bf16.gmra.mrb[0].mxu0 %v695
    %v745 = vpop.f32.mrb[0].mxu0
    %v746 = vadd.f32 %v332, %v745
    %v747 = vpop.f32.mrb[0].mxu0
    %v748 = vpop.f32.mrb[0].mxu0
    %v749 = vadd.f32 %v333, %v748
    %v750 = vpop.f32.mrb[0].mxu0
    %751 = vdwg.mxu0
    %v752 = vsel %vm108, %v738, -inf
    %753 = vmax.xlane.f32.xlu0 %v752
    %v754 = vpop.xlane.xlu0 %753
    %v755 = vsel %vm108, %v741, -inf
    %756 = vmax.xlane.f32.xlu0 %v755
    %v757 = vpop.xlane.xlu0 %756
    %v758 = vsel %vm108, %v746, -inf
    %759 = vmax.xlane.f32.xlu0 %v758
    %v760 = vpop.xlane.xlu0 %759
    %v761 = vsel %vm108, %v749, -inf
    %762 = vmax.xlane.f32.xlu0 %v761
    %v763 = vpop.xlane.xlu0 %762
    %v764 = vsub.f32 %v738, %v754
    %v765 = vsub.f32 %v741, %v757
    %v766 = vsub.f32 %v746, %v760
    %v767 = vsub.f32 %v749, %v763
    %v768 = vmul.f32 %v764, 1.442695
    %v769 = vpow.pop %v768
    %v770 = vmul.f32 %v765, 1.442695
    %v771 = vpow.pop %v770
    %v772 = vmul.f32 %v766, 1.442695
    %v773 = vpow.pop %v772
    %v774 = vmul.f32 %v767, 1.442695
    %v775 = vpow.pop %v774
    %v776 = vsel %vm108, %v769, 0.0
    %777 = vadd.xlane.f32.xlu0 %v776
    %v778 = vpop.xlane.xlu0 %777
    %v779 = vsel %vm108, %v771, 0.0
    %780 = vadd.xlane.f32.xlu0 %v779
    %v781 = vpop.xlane.xlu0 %780
    %v782 = vsel %vm108, %v773, 0.0
    %783 = vadd.xlane.f32.xlu0 %v782
    %v784 = vpop.xlane.xlu0 %783
    %v785 = vsel %vm108, %v775, 0.0
    %786 = vadd.xlane.f32.xlu0 %v785
    %v787 = vpop.xlane.xlu0 %786
    %v788 = vrcp.pop %v778
    %v789 = vrcp.pop %v781
    %v790 = vrcp.pop %v784
    %v791 = vrcp.pop %v787
    %v792 = vmul.f32 %v769, %v788
    %v793 = vmul.f32 %v771, %v789
    %v794 = vmul.f32 %v773, %v790
    %v795 = vmul.f32 %v775, %v791
    %v796 = vpack.c.bf16 %v793, %v792
    %v797 = vpack.c.bf16 %v795, %v794
    %798 = vrot.lane.b32.xlu0 %v259, 32
    %v799 = vpop.permute.xlu0 %798
    %800 = vrot.lane.b32.xlu0 %v261, 32
    %v801 = vpop.permute.xlu0 %800
    %v805 = vsel %vm108, %v796, 0
    %v808 = vsel %vm108, %v797, 0
    %810 = vmatprep.subr.bf16.mxu0 0
    %811 = vmatpush1.bf16.msra.mxu0 %v799
    %812 = vmatprep.subr.bf16.mxu0 0
    %813 = vmatpush1.bf16.msra.mxu0 %v801
    %814 = vmatprep.subr.bf16.mxu0 0
    %815 = vmatpush1.bf16.msra.mxu0 0
    %816 = vmatprep.subr.bf16.mxu0 0
    %817 = vmatpush1.bf16.msra.mxu0 0
    %818 = vmatprep.subr.bf16.mxu0 0
    %819 = vmatpush1.bf16.msra.mxu0 0
    %820 = vmatprep.subr.bf16.mxu0 0
    %821 = vmatpush1.bf16.msra.mxu0 0
    %822 = vmatprep.subr.bf16.mxu0 0
    %823 = vmatpush1.bf16.msra.mxu0 0
    %824 = vmatprep.subr.bf16.mxu0 0
    %825 = vmatpush1.bf16.msra.mxu0 0
    %826 = vmatprep.subr.bf16.mxu0 0
    %827 = vmatpush1.bf16.msra.mxu0 0
    %828 = vmatprep.subr.bf16.mxu0 0
    %829 = vmatpush1.bf16.msra.mxu0 0
    %830 = vmatprep.subr.bf16.mxu0 0
    %831 = vmatpush1.bf16.msra.mxu0 0
    %832 = vmatprep.subr.bf16.mxu0 0
    %833 = vmatpush1.bf16.msra.mxu0 0
    %834 = vmatprep.subr.bf16.mxu0 0
    %835 = vmatpush1.bf16.msra.mxu0 0
    %836 = vmatprep.subr.bf16.mxu0 0
    %837 = vmatpush1.bf16.msra.mxu0 0
    %838 = vmatprep.subr.bf16.mxu0 0
    %839 = vmatpush1.bf16.msra.mxu0 0
    %840 = vmatprep.subr.bf16.mxu0 0
    %841 = vmatpush1.bf16.msra.mxu0 0
    %842 = vmatprep.mubr.bf16.mxu0 0
    %843 = vmatmul.mubr.bf16.gmra.mrb[0].mxu0 %v805
    %v844 = vpop.f32.mrb[0].mxu0
    %v845 = vadd.f32 0.0, %v844
    %v846 = vpop.f32.mrb[0].mxu0
    %v847 = vpop.f32.mrb[0].mxu0
    %v848 = vadd.f32 0.0, %v847
    %v849 = vpop.f32.mrb[0].mxu0
    %850 = vmatprep.mubr.bf16.mxu0 0
    %851 = vmatmul.mubr.bf16.gmra.mrb[0].mxu0 %v808
    %v852 = vpop.f32.mrb[0].mxu0
    %v853 = vadd.f32 0.0, %v852
    %v854 = vpop.f32.mrb[0].mxu0
    %v855 = vpop.f32.mrb[0].mxu0
    %v856 = vadd.f32 0.0, %v855
    %v857 = vpop.f32.mrb[0].mxu0
    %858 = vdwg.mxu0
    %v859 = vadd.f32 %v669, %v845
    %v860 = vadd.f32 %v672, %v848
    %v861 = vadd.f32 %v677, %v853
    %v862 = vadd.f32 %v680, %v856
    %863 = vrot.lane.b32.xlu0 %v257, 104
    %v864 = vpop.permute.xlu0 %863
    %865 = vrot.lane.b32.xlu0 %v258, 104
    %v866 = vpop.permute.xlu0 %865
    %867 = vrot.lane.b32.xlu0 %v259, 104
    %v868 = vpop.permute.xlu0 %867
    %869 = vrot.lane.b32.xlu0 %v261, 104
    %v870 = vpop.permute.xlu0 %869
    %v872 = vsel %vm334, %v864, 0
    %v875 = vsel %vm334, %v866, 0
    %v878 = vsel %vm334, %v868, 0
    %v881 = vsel %vm334, %v870, 0
    %883 = vmatprep.subr.bf16.mxu0 0
    %884 = vmatpush1.bf16.xpose.msra.mxu0 %v878
    %885 = vmatprep.subr.bf16.mxu0 0
    %886 = vmatpush1.bf16.xpose.msra.mxu0 %v881
    %887 = vmatprep.subr.bf16.mxu0 0
    %888 = vmatpush1.bf16.xpose.msra.mxu0 0
    %889 = vmatprep.subr.bf16.mxu0 0
    %890 = vmatpush1.bf16.xpose.msra.mxu0 0
    %891 = vmatprep.subr.bf16.mxu0 0
    %892 = vmatpush1.bf16.xpose.msra.mxu0 0
    %893 = vmatprep.subr.bf16.mxu0 0
    %894 = vmatpush1.bf16.xpose.msra.mxu0 0
    %895 = vmatprep.subr.bf16.mxu0 0
    %896 = vmatpush1.bf16.xpose.msra.mxu0 0
    %897 = vmatprep.subr.bf16.mxu0 0
    %898 = vmatpush1.bf16.xpose.msra.mxu0 0
    %899 = vmatprep.subr.bf16.mxu0 0
    %900 = vmatpush1.bf16.xpose.msra.mxu0 0
    %901 = vmatprep.subr.bf16.mxu0 0
    %902 = vmatpush1.bf16.xpose.msra.mxu0 0
    %903 = vmatprep.subr.bf16.mxu0 0
    %904 = vmatpush1.bf16.xpose.msra.mxu0 0
    %905 = vmatprep.subr.bf16.mxu0 0
    %906 = vmatpush1.bf16.xpose.msra.mxu0 0
    %907 = vmatprep.subr.bf16.mxu0 0
    %908 = vmatpush1.bf16.xpose.msra.mxu0 0
    %909 = vmatprep.subr.bf16.mxu0 0
    %910 = vmatpush1.bf16.xpose.msra.mxu0 0
    %911 = vmatprep.subr.bf16.mxu0 0
    %912 = vmatpush1.bf16.xpose.msra.mxu0 0
    %913 = vmatprep.subr.bf16.mxu0 0
    %914 = vmatpush1.bf16.xpose.msra.mxu0 0
    %915 = vmatprep.mubr.bf16.mxu0 0
    %916 = vmatmul.mubr.bf16.gmra.mrb[0].mxu0 %v872
    %v917 = vpop.f32.mrb[0].mxu0
    %v918 = vadd.f32 %v330, %v917
    %v919 = vpop.f32.mrb[0].mxu0
    %v920 = vpop.f32.mrb[0].mxu0
    %v921 = vadd.f32 %v331, %v920
    %v922 = vpop.f32.mrb[0].mxu0
    %923 = vmatprep.mubr.bf16.mxu0 0
    %924 = vmatmul.mubr.bf16.gmra.mrb[0].mxu0 %v875
    %v925 = vpop.f32.mrb[0].mxu0
    %v926 = vadd.f32 %v332, %v925
    %v927 = vpop.f32.mrb[0].mxu0
    %v928 = vpop.f32.mrb[0].mxu0
    %v929 = vadd.f32 %v333, %v928
    %v930 = vpop.f32.mrb[0].mxu0
    %931 = vdwg.mxu0
    %v932 = vsel %vm108, %v918, -inf
    %933 = vmax.xlane.f32.xlu0 %v932
    %v934 = vpop.xlane.xlu0 %933
    %v935 = vsel %vm108, %v921, -inf
    %936 = vmax.xlane.f32.xlu0 %v935
    %v937 = vpop.xlane.xlu0 %936
    %v938 = vsel %vm108, %v926, -inf
    %939 = vmax.xlane.f32.xlu0 %v938
    %v940 = vpop.xlane.xlu0 %939
    %v941 = vsel %vm108, %v929, -inf
    %942 = vmax.xlane.f32.xlu0 %v941
    %v943 = vpop.xlane.xlu0 %942
    %v944 = vsub.f32 %v918, %v934
    %v945 = vsub.f32 %v921, %v937
    %v946 = vsub.f32 %v926, %v940
    %v947 = vsub.f32 %v929, %v943
    %v948 = vmul.f32 %v944, 1.442695
    %v949 = vpow.pop %v948
    %v950 = vmul.f32 %v945, 1.442695
    %v951 = vpow.pop %v950
    %v952 = vmul.f32 %v946, 1.442695
    %v953 = vpow.pop %v952
    %v954 = vmul.f32 %v947, 1.442695
    %v955 = vpow.pop %v954
    %v956 = vsel %vm108, %v949, 0.0
    %957 = vadd.xlane.f32.xlu0 %v956
    %v958 = vpop.xlane.xlu0 %957
    %v959 = vsel %vm108, %v951, 0.0
    %960 = vadd.xlane.f32.xlu0 %v959
    %v961 = vpop.xlane.xlu0 %960
    %v962 = vsel %vm108, %v953, 0.0
    %963 = vadd.xlane.f32.xlu0 %v962
    %v964 = vpop.xlane.xlu0 %963
    %v965 = vsel %vm108, %v955, 0.0
    %966 = vadd.xlane.f32.xlu0 %v965
    %v967 = vpop.xlane.xlu0 %966
    %v968 = vrcp.pop %v958
    %v969 = vrcp.pop %v961
    %v970 = vrcp.pop %v964
    %v971 = vrcp.pop %v967
    %v972 = vmul.f32 %v949, %v968
    %v973 = vmul.f32 %v951, %v969
    %v974 = vmul.f32 %v953, %v970
    %v975 = vmul.f32 %v955, %v971
    %v976 = vpack.c.bf16 %v973, %v972
    %v977 = vpack.c.bf16 %v975, %v974
    %v979 = vsel %vm108, %v976, 0
    %v982 = vsel %vm108, %v977, 0
    %984 = vmatprep.subr.bf16.mxu0 0
    %985 = vmatpush1.bf16.msra.mxu0 %v260
    %986 = vmatprep.subr.bf16.mxu0 0
    %987 = vmatpush1.bf16.msra.mxu0 %v262
    %988 = vmatprep.subr.bf16.mxu0 0
    %989 = vmatpush1.bf16.msra.mxu0 0
    %990 = vmatprep.subr.bf16.mxu0 0
    %991 = vmatpush1.bf16.msra.mxu0 0
    %992 = vmatprep.subr.bf16.mxu0 0
    %993 = vmatpush1.bf16.msra.mxu0 0
    %994 = vmatprep.subr.bf16.mxu0 0
    %995 = vmatpush1.bf16.msra.mxu0 0
    %996 = vmatprep.subr.bf16.mxu0 0
    %997 = vmatpush1.bf16.msra.mxu0 0
    %998 = vmatprep.subr.bf16.mxu0 0
    %999 = vmatpush1.bf16.msra.mxu0 0
    %1000 = vmatprep.subr.bf16.mxu0 0
    %1001 = vmatpush1.bf16.msra.mxu0 0
    %1002 = vmatprep.subr.bf16.mxu0 0
    %1003 = vmatpush1.bf16.msra.mxu0 0
    %1004 = vmatprep.subr.bf16.mxu0 0
    %1005 = vmatpush1.bf16.msra.mxu0 0
    %1006 = vmatprep.subr.bf16.mxu0 0
    %1007 = vmatpush1.bf16.msra.mxu0 0
    %1008 = vmatprep.subr.bf16.mxu0 0
    %1009 = vmatpush1.bf16.msra.mxu0 0
    %1010 = vmatprep.subr.bf16.mxu0 0
    %1011 = vmatpush1.bf16.msra.mxu0 0
    %1012 = vmatprep.subr.bf16.mxu0 0
    %1013 = vmatpush1.bf16.msra.mxu0 0
    %1014 = vmatprep.subr.bf16.mxu0 0
    %1015 = vmatpush1.bf16.msra.mxu0 0
    %1016 = vmatprep.mubr.bf16.mxu0 0
    %1017 = vmatmul.mubr.bf16.gmra.mrb[0].mxu0 %v979
    %v1018 = vpop.f32.mrb[0].mxu0
    %v1019 = vadd.f32 0.0, %v1018
    %v1020 = vpop.f32.mrb[0].mxu0
    %v1021 = vpop.f32.mrb[0].mxu0
    %v1022 = vadd.f32 0.0, %v1021
    %v1023 = vpop.f32.mrb[0].mxu0
    %1024 = vmatprep.mubr.bf16.mxu0 0
    %1025 = vmatmul.mubr.bf16.gmra.mrb[0].mxu0 %v982
    %v1026 = vpop.f32.mrb[0].mxu0
    %v1027 = vadd.f32 0.0, %v1026
    %v1028 = vpop.f32.mrb[0].mxu0
    %v1029 = vpop.f32.mrb[0].mxu0
    %v1030 = vadd.f32 0.0, %v1029
    %v1031 = vpop.f32.mrb[0].mxu0
    %1032 = vdwg.mxu0
    %v1033 = vadd.f32 %v859, %v1019
    %v1034 = vadd.f32 %v860, %v1022
    %v1035 = vadd.f32 %v861, %v1027
    %v1036 = vadd.f32 %v862, %v1030
    %v1037 = vlaneseq
    %v1038 = vshrl.u32 %v1037, 7
    %v1039 = vsub.s32 2, %v1038
    %v1040 = vrot.slane %v77, %v1039
    %v1041 = vadd.f32 %v1033, %v1040
    %v1042 = vadd.f32 %v1034, %v1040
    %v1043 = vadd.f32 %v1035, %v1040
    %v1044 = vadd.f32 %v1036, %v1040
    %v1045 = vadd.f32 %v82, %v1041
    %v1046 = vadd.f32 %v83, %v1042
    %v1047 = vadd.f32 %v84, %v1043
    %v1048 = vadd.f32 %v85, %v1044
    %v1049 = vsel %vm108, %v1045, 0.0
    %1050 = vadd.xlane.f32.xlu0 %v1049
    %v1051 = vpop.xlane.xlu0 %1050
    %v1052 = vsel %vm108, %v1046, 0.0
    %1053 = vadd.xlane.f32.xlu0 %v1052
    %v1054 = vpop.xlane.xlu0 %1053
    %v1055 = vsel %vm108, %v1047, 0.0
    %1056 = vadd.xlane.f32.xlu0 %v1055
    %v1057 = vpop.xlane.xlu0 %1056
    %v1058 = vsel %vm108, %v1048, 0.0
    %1059 = vadd.xlane.f32.xlu0 %v1058
    %v1060 = vpop.xlane.xlu0 %1059
    %v1061 = vrcp.pop 32.0
    %v1062 = vmul.f32 %v1051, %v1061
    %v1063 = vmul.f32 %v1054, %v1061
    %v1064 = vmul.f32 %v1057, %v1061
    %v1065 = vmul.f32 %v1060, %v1061
    %v1066 = vsub.f32 %v1045, %v1062
    %v1067 = vsub.f32 %v1046, %v1063
    %v1068 = vsub.f32 %v1047, %v1064
    %v1069 = vsub.f32 %v1048, %v1065
    %v1070 = vmul.f32 %v1066, %v1066
    %v1071 = vmul.f32 %v1067, %v1067
    %v1072 = vmul.f32 %v1068, %v1068
    %v1073 = vmul.f32 %v1069, %v1069
    %v1074 = vsel %vm108, %v1070, 0.0
    %1075 = vadd.xlane.f32.xlu0 %v1074
    %v1076 = vpop.xlane.xlu0 %1075
    %v1077 = vsel %vm108, %v1071, 0.0
    %1078 = vadd.xlane.f32.xlu0 %v1077
    %v1079 = vpop.xlane.xlu0 %1078
    %v1080 = vsel %vm108, %v1072, 0.0
    %1081 = vadd.xlane.f32.xlu0 %v1080
    %v1082 = vpop.xlane.xlu0 %1081
    %v1083 = vsel %vm108, %v1073, 0.0
    %1084 = vadd.xlane.f32.xlu0 %v1083
    %v1085 = vpop.xlane.xlu0 %1084
    %v1086 = vmul.f32 %v1076, %v1061
    %v1087 = vmul.f32 %v1079, %v1061
    %v1088 = vmul.f32 %v1082, %v1061
    %v1089 = vmul.f32 %v1085, %v1061
    %v1090 = vadd.f32 %v1086, 1e-05
    %v1091 = vadd.f32 %v1087, 1e-05
    %v1092 = vadd.f32 %v1088, 1e-05
    %v1093 = vadd.f32 %v1089, 1e-05
    %v1094 = vrsqrt.pop %v1090
    %v1095 = vrsqrt.pop %v1091
    %v1096 = vrsqrt.pop %v1092
    %v1097 = vrsqrt.pop %v1093
    %v1098 = vmul.f32 %v1066, %v1094
    %v1099 = vmul.f32 %v1067, %v1095
    %v1100 = vmul.f32 %v1068, %v1096
    %v1101 = vmul.f32 %v1069, %v1097
    %v1102 = vlaneseq
    %v1103 = vshrl.u32 %v1102, 7
    %v1104 = vsub.s32 5, %v1103
    %v1105 = vrot.slane %v77, %v1104
    %v1106 = vmul.f32 %v1098, %v1105
    %v1107 = vmul.f32 %v1099, %v1105
    %v1108 = vmul.f32 %v1100, %v1105
    %v1109 = vmul.f32 %v1101, %v1105
    %v1110 = vlaneseq
    %v1111 = vshrl.u32 %v1110, 7
    %v1112 = vsub.s32 6, %v1111
    %v1113 = vrot.slane %v77, %v1112
    %v1114 = vadd.f32 %v1106, %v1113
    %v1115 = vadd.f32 %v1107, %v1113
    %v1116 = vadd.f32 %v1108, %v1113
    %v1117 = vadd.f32 %v1109, %v1113
    %v1118 = vpack.c.bf16 %v1115, %v1114
    %v1119 = vpack.c.bf16 %v1117, %v1116
    %v1120 = vld [vmem:[#allocation9] sm:$0xf]
    %v1121 = vld [vmem:[#allocation9 + $0x4] sm:$0xf]
    %v1122 = vld [vmem:[#allocation9 + $0x8] sm:$0xf]
    %v1123 = vld [vmem:[#allocation9 + $0xc] sm:$0xf]
    %v1124 = vlaneseq
    %v1125 = vshrl.u32 %v1124, 7
    %v1126 = vsub.s32 3, %v1125
    %v1127 = vrot.slane %v77, %v1126
    %v1132 = vunpack.c.l.b16 %v1120
    %v1133 = vunpack.c.l.b16 %v1121
    %v1134 = vunpack.c.l.b16 %v1122
    %v1135 = vunpack.c.l.b16 %v1123
    %v1136 = vpack.c.b16 %v1133, %v1132
    %v1137 = vpack.c.b16 %v1135, %v1134
    %v1141 = vsel %vm108, %v1118, 0
    %v1144 = vsel %vm108, %v1119, 0
    %1146 = vmatprep.subr.bf16.mxu0 0
    %1147 = vmatpush1.bf16.msra.mxu0 %v1136
    %1148 = vmatprep.subr.bf16.mxu0 0
    %1149 = vmatpush1.bf16.msra.mxu0 %v1137
    %1150 = vmatprep.subr.bf16.mxu0 0
    %1151 = vmatpush1.bf16.msra.mxu0 0
    %1152 = vmatprep.subr.bf16.mxu0 0
    %1153 = vmatpush1.bf16.msra.mxu0 0
    %1154 = vmatprep.subr.bf16.mxu0 0
    %1155 = vmatpush1.bf16.msra.mxu0 0
    %1156 = vmatprep.subr.bf16.mxu0 0
    %1157 = vmatpush1.bf16.msra.mxu0 0
    %1158 = vmatprep.subr.bf16.mxu0 0
    %1159 = vmatpush1.bf16.msra.mxu0 0
    %1160 = vmatprep.subr.bf16.mxu0 0
    %1161 = vmatpush1.bf16.msra.mxu0 0
    %1162 = vmatprep.subr.bf16.mxu0 0
    %1163 = vmatpush1.bf16.msra.mxu0 0
    %1164 = vmatprep.subr.bf16.mxu0 0
    %1165 = vmatpush1.bf16.msra.mxu0 0
    %1166 = vmatprep.subr.bf16.mxu0 0
    %1167 = vmatpush1.bf16.msra.mxu0 0
    %1168 = vmatprep.subr.bf16.mxu0 0
    %1169 = vmatpush1.bf16.msra.mxu0 0
    %1170 = vmatprep.subr.bf16.mxu0 0
    %1171 = vmatpush1.bf16.msra.mxu0 0
    %1172 = vmatprep.subr.bf16.mxu0 0
    %1173 = vmatpush1.bf16.msra.mxu0 0
    %1174 = vmatprep.subr.bf16.mxu0 0
    %1175 = vmatpush1.bf16.msra.mxu0 0
    %1176 = vmatprep.subr.bf16.mxu0 0
    %1177 = vmatpush1.bf16.msra.mxu0 0
    %1178 = vmatprep.mubr.bf16.mxu0 0
    %1179 = vmatmul.mubr.bf16.gmra.mrb[0].mxu0 %v1141
    %v1180 = vpop.f32.mrb[0].mxu0
    %v1181 = vadd.f32 %v1127, %v1180
    %v1182 = vpop.f32.mrb[0].mxu0
    %v1183 = vpop.f32.mrb[0].mxu0
    %v1184 = vadd.f32 %v1127, %v1183
    %v1185 = vpop.f32.mrb[0].mxu0
    %1186 = vmatprep.mubr.bf16.mxu0 0
    %1187 = vmatmul.mubr.bf16.gmra.mrb[0].mxu0 %v1144
    %v1188 = vpop.f32.mrb[0].mxu0
    %v1189 = vadd.f32 %v1127, %v1188
    %v1190 = vpop.f32.mrb[0].mxu0
    %v1191 = vpop.f32.mrb[0].mxu0
    %v1192 = vadd.f32 %v1127, %v1191
    %v1193 = vpop.f32.mrb[0].mxu0
    %1194 = vdwg.mxu0
    %v1195 = vmax.f32 %v1181, 0.0
    %v1196 = vmax.f32 %v1184, 0.0
    %v1197 = vmax.f32 %v1189, 0.0
    %v1198 = vmax.f32 %v1192, 0.0
    %v1199 = vpack.c.bf16 %v1196, %v1195
    %v1200 = vpack.c.bf16 %v1198, %v1197
    %v1201 = vld [vmem:[%s5] sm:$0xf]
    %v1202 = vld [vmem:[%s5 + $0x4] sm:$0xf]
    %v1203 = vld [vmem:[%s5 + $0x8] sm:$0xf]
    %v1204 = vld [vmem:[%s5 + $0xc] sm:$0xf]
    %v1205 = vld [vmem:[%s5 + $0x10] sm:$0xf]
    %v1206 = vld [vmem:[%s5 + $0x14] sm:$0xf]
    %v1207 = vld [vmem:[%s5 + $0x18] sm:$0xf]
    %v1208 = vld [vmem:[%s5 + $0x1c] sm:$0xf]
    %v1209 = vlaneseq
    %v1210 = vshrl.u32 %v1209, 7
    %v1211 = vsub.s32 4, %v1210
    %v1212 = vrot.slane %v77, %v1211
    %v1221 = vunpack.c.l.b16 %v1201
    %v1222 = vunpack.c.l.b16 %v1202
    %v1223 = vunpack.c.l.b16 %v1203
    %v1224 = vunpack.c.l.b16 %v1204
    %v1225 = vunpack.c.l.b16 %v1205
    %v1226 = vunpack.c.l.b16 %v1206
    %v1227 = vunpack.c.l.b16 %v1207
    %v1228 = vunpack.c.l.b16 %v1208
    %v1229 = vpack.c.b16 %v1222, %v1221
    %v1230 = vpack.c.b16 %v1224, %v1223
    %v1231 = vpack.c.b16 %v1226, %v1225
    %v1232 = vpack.c.b16 %v1228, %v1227
    %vm1237 = vcmask 523264
    %v1239 = vsel %vm1237, %v1199, 0
    %v1242 = vsel %vm1237, %v1200, 0
    %1244 = vmatprep.subr.bf16.mxu0 0
    %1245 = vmatpush1.bf16.msra.mxu0 %v1229
    %1246 = vmatprep.subr.bf16.mxu0 0
    %1247 = vmatpush1.bf16.msra.mxu0 %v1230
    %1248 = vmatprep.subr.bf16.mxu0 0
    %1249 = vmatpush1.bf16.msra.mxu0 %v1231
    %1250 = vmatprep.subr.bf16.mxu0 0
    %1251 = vmatpush1.bf16.msra.mxu0 %v1232
    %1252 = vmatprep.subr.bf16.mxu0 0
    %1253 = vmatpush1.bf16.msra.mxu0 0
    %1254 = vmatprep.subr.bf16.mxu0 0
    %1255 = vmatpush1.bf16.msra.mxu0 0
    %1256 = vmatprep.subr.bf16.mxu0 0
    %1257 = vmatpush1.bf16.msra.mxu0 0
    %1258 = vmatprep.subr.bf16.mxu0 0
    %1259 = vmatpush1.bf16.msra.mxu0 0
    %1260 = vmatprep.subr.bf16.mxu0 0
    %1261 = vmatpush1.bf16.msra.mxu0 0
    %1262 = vmatprep.subr.bf16.mxu0 0
    %1263 = vmatpush1.bf16.msra.mxu0 0
    %1264 = vmatprep.subr.bf16.mxu0 0
    %1265 = vmatpush1.bf16.msra.mxu0 0
    %1266 = vmatprep.subr.bf16.mxu0 0
    %1267 = vmatpush1.bf16.msra.mxu0 0
    %1268 = vmatprep.subr.bf16.mxu0 0
    %1269 = vmatpush1.bf16.msra.mxu0 0
    %1270 = vmatprep.subr.bf16.mxu0 0
    %1271 = vmatpush1.bf16.msra.mxu0 0
    %1272 = vmatprep.subr.bf16.mxu0 0
    %1273 = vmatpush1.bf16.msra.mxu0 0
    %1274 = vmatprep.subr.bf16.mxu0 0
    %1275 = vmatpush1.bf16.msra.mxu0 0
    %1276 = vmatprep.mubr.bf16.mxu0 0
    %1277 = vmatmul.mubr.bf16.gmra.mrb[0].mxu0 %v1239
    %v1278 = vpop.f32.mrb[0].mxu0
    %v1279 = vadd.f32 %v1212, %v1278
    %v1280 = vpop.f32.mrb[0].mxu0
    %v1281 = vpop.f32.mrb[0].mxu0
    %v1282 = vadd.f32 %v1212, %v1281
    %v1283 = vpop.f32.mrb[0].mxu0
    %1284 = vmatprep.mubr.bf16.mxu0 0
    %1285 = vmatmul.mubr.bf16.gmra.mrb[0].mxu0 %v1242
    %v1286 = vpop.f32.mrb[0].mxu0
    %v1287 = vadd.f32 %v1212, %v1286
    %v1288 = vpop.f32.mrb[0].mxu0
    %v1289 = vpop.f32.mrb[0].mxu0
    %v1290 = vadd.f32 %v1212, %v1289
    %v1291 = vpop.f32.mrb[0].mxu0
    %1292 = vdwg.mxu0
    %v1293 = vadd.f32 %v1114, %v1279
    %v1294 = vadd.f32 %v1115, %v1282
    %v1295 = vadd.f32 %v1116, %v1287
    %v1296 = vadd.f32 %v1117, %v1290
    %v1297 = vsel %vm108, %v1293, 0.0
    %1298 = vadd.xlane.f32.xlu0 %v1297
    %v1299 = vpop.xlane.xlu0 %1298
    %v1300 = vsel %vm108, %v1294, 0.0
    %1301 = vadd.xlane.f32.xlu0 %v1300
    %v1302 = vpop.xlane.xlu0 %1301
    %v1303 = vsel %vm108, %v1295, 0.0
    %1304 = vadd.xlane.f32.xlu0 %v1303
    %v1305 = vpop.xlane.xlu0 %1304
    %v1306 = vsel %vm108, %v1296, 0.0
    %1307 = vadd.xlane.f32.xlu0 %v1306
    %v1308 = vpop.xlane.xlu0 %1307
    %v1309 = vmul.f32 %v1299, %v1061
    %v1310 = vmul.f32 %v1302, %v1061
    %v1311 = vmul.f32 %v1305, %v1061
    %v1312 = vmul.f32 %v1308, %v1061
    %v1313 = vsub.f32 %v1293, %v1309
    %v1314 = vsub.f32 %v1294, %v1310
    %v1315 = vsub.f32 %v1295, %v1311
    %v1316 = vsub.f32 %v1296, %v1312
    %v1317 = vmul.f32 %v1313, %v1313
    %v1318 = vmul.f32 %v1314, %v1314
    %v1319 = vmul.f32 %v1315, %v1315
    %v1320 = vmul.f32 %v1316, %v1316
    %v1321 = vsel %vm108, %v1317, 0.0
    %1322 = vadd.xlane.f32.xlu0 %v1321
    %v1323 = vpop.xlane.xlu0 %1322
    %v1324 = vsel %vm108, %v1318, 0.0
    %1325 = vadd.xlane.f32.xlu0 %v1324
    %v1326 = vpop.xlane.xlu0 %1325
    %v1327 = vsel %vm108, %v1319, 0.0
    %1328 = vadd.xlane.f32.xlu0 %v1327
    %v1329 = vpop.xlane.xlu0 %1328
    %v1330 = vsel %vm108, %v1320, 0.0
    %1331 = vadd.xlane.f32.xlu0 %v1330
    %v1332 = vpop.xlane.xlu0 %1331
    %v1333 = vmul.f32 %v1323, %v1061
    %v1334 = vmul.f32 %v1326, %v1061
    %v1335 = vmul.f32 %v1329, %v1061
    %v1336 = vmul.f32 %v1332, %v1061
    %v1337 = vadd.f32 %v1333, 1e-05
    %v1338 = vadd.f32 %v1334, 1e-05
    %v1339 = vadd.f32 %v1335, 1e-05
    %v1340 = vadd.f32 %v1336, 1e-05
    %v1341 = vrsqrt.pop %v1337
    %v1342 = vrsqrt.pop %v1338
    %v1343 = vrsqrt.pop %v1339
    %v1344 = vrsqrt.pop %v1340
    %v1345 = vmul.f32 %v1313, %v1341
    %v1346 = vmul.f32 %v1314, %v1342
    %v1347 = vmul.f32 %v1315, %v1343
    %v1348 = vmul.f32 %v1316, %v1344
    %v1349 = vlaneseq
    %v1350 = vshrl.u32 %v1349, 7
    %v1351 = vsub.s32 7, %v1350
    %v1352 = vrot.slane %v77, %v1351
    %v1353 = vmul.f32 %v1345, %v1352
    %v1354 = vmul.f32 %v1346, %v1352
    %v1355 = vmul.f32 %v1347, %v1352
    %v1356 = vmul.f32 %v1348, %v1352
    %v1357 = vlaneseq
    %v1358 = vshrl.u32 %v1357, 7
    %v1359 = vsub.s32 0, %v1358
    %v1360 = vrot.slane %v79, %v1359
    %v1361 = vadd.f32 %v1353, %v1360
    %v1362 = vadd.f32 %v1354, %v1360
    %v1363 = vadd.f32 %v1355, %v1360
    %v1364 = vadd.f32 %v1356, %v1360
    %1365 = vst.msk [vmem:[#allocation10] sm:$0xff] %vm108, %v1361
    %1366 = vst.msk [vmem:[#allocation10 + $0x8] sm:$0xff] %vm108, %v1362
    %1367 = vst.msk [vmem:[#allocation10 + $0x10] sm:$0xff] %vm108, %v1363
    %1368 = vst.msk [vmem:[#allocation10 + $0x18] sm:$0xff] %vm108, %v1364
    // Predicated region
    $region38: #{tpu_custom_call.1} parent=1 // pred_check
      _
    $region39: #{tpu_custom_call.1} parent=1 // pred_check_branch
      %1370 = sbr.rel (0) target = $region41
    $region40: #{tpu_custom_call.1} parent=1 // pred_region
      %s1372 = ssub.s32 512, 512
      %1373 = vsyncadd [#allocation6], %s1372
      %s1374 = sshll.u32 [#allocation10], 4
      %s1375 = int_to_ptr.vmem [resolvable:$true] %s1374
      %1380 = dma.vmem_to_hbm [thread:$0]  %s1375, 512, %s7, [#allocation6], 128, 128, 8
    $region41: #{tpu_custom_call.1} parent=1 // pred_fallthru
      _
    // Predicated region
    $region42: #{tpu_custom_call.1} parent=1 // pred_check
      _
    $region43: #{tpu_custom_call.1} parent=1 // pred_check_branch
      %1382 = sbr.rel (0) target = $region45
    $region44: #{tpu_custom_call.1} parent=1 // pred_region
      %1383 = dma.done [#allocation6], 512
    $region45: #{tpu_custom_call.1} parent=1 // pred_fallthru
      _
    %1384 = vsyncpa [#allocation5], 1
    %1385 = vsyncpa [#allocation8], 1
    %1386 = vsyncpa [#allocation6], 1

</llo_original>
